<compile_context>
chip_gen: v6e
topology: v6e:2x2x1
jax: 0.10.0
libtpu: 0.0.40
codegen_flags: <defaults>
</compile_context>

<pallas_src>
import functools
import math

import jax
import jax.numpy as jnp
from jax.experimental import pallas as pl
from jax.experimental.pallas import tpu as pltpu


def _round_up(x, m):
    return (x + m - 1) // m * m


# ---------------------------------------------------------------------------
# Kernels
# ---------------------------------------------------------------------------

def _dual_path_slab_kernel(x_ref, p_ref, w1t_ref, b1_ref, w2t_ref, b2_ref,
                           o_ref, *, inv_sqrt_hw, matmul_dtype, block_b):
    """Single-pass kernel: full [C, HW] / [HW, C] slabs for `block_b` batch
    elements are VMEM-resident.  All matmuls are plain 2-D MXU matmuls (no
    broadcast-materialized weights)."""
    # x_ref  : [Bb, C, HW]   p_ref : [Bb, HW, C]
    # w1t_ref: [C, ID]       b1_ref: [1, ID]
    # w2t_ref: [ID, C]       b2_ref: [1, C]
    # o_ref  : [Bb, HW, C]
    w1t = w1t_ref[...]
    w2t = w2t_ref[...]
    b1 = b1_ref[...]
    b2 = b2_ref[...]
    for b in range(block_b):                      # unrolled at trace time
        x = x_ref[b].astype(matmul_dtype)                         # [C, HW]
        p = p_ref[b].astype(matmul_dtype)                         # [HW, C]
        # allocation_matrix = xpl_flat @ ppl_flat (contraction over HW)
        a = jnp.dot(x, p, preferred_element_type=jnp.float32)     # [C, C] f32
        # tiny MLP (Linear -> ReLU -> Linear) in f32
        h = jnp.maximum(
            jnp.dot(a, w1t, preferred_element_type=jnp.float32) + b1, 0.0)
        m = (jnp.dot(h, w2t, preferred_element_type=jnp.float32) + b2) * inv_sqrt_hw
        # weighted_features = ppl_flat @ M (contraction over C)
        out = jnp.dot(p, m.astype(matmul_dtype),
                      preferred_element_type=jnp.float32)          # [HW, C]
        o_ref[b] = out.astype(o_ref.dtype)


def _dual_path_m_kernel(x_ref, p_ref, w1t_ref, b1_ref, w2t_ref, b2_ref,
                        m_ref, acc_ref, *, inv_sqrt_hw, matmul_dtype):
    """Chunked pass 1: accumulate A over HW chunks, apply the MLP at the last
    chunk.  Grid = (B, HW // t_hw), HW axis is the ('arbitrary') reduction."""
    k = pl.program_id(1)

    @pl.when(k == 0)
    def _init():
        acc_ref[...] = jnp.zeros_like(acc_ref)

    x = x_ref[0].astype(matmul_dtype)                              # [C, t_hw]
    p = p_ref[0].astype(matmul_dtype)                              # [t_hw, C]
    acc_ref[...] += jnp.dot(x, p, preferred_element_type=jnp.float32)

    @pl.when(k == pl.num_programs(1) - 1)
    def _finalize():
        a = acc_ref[...]
        h = jnp.maximum(
            jnp.dot(a, w1t_ref[...], preferred_element_type=jnp.float32)
            + b1_ref[...], 0.0)
        m = (jnp.dot(h, w2t_ref[...], preferred_element_type=jnp.float32)
             + b2_ref[...]) * inv_sqrt_hw
        m_ref[0] = m.astype(m_ref.dtype)


def _dual_path_apply_kernel(p_ref, m_ref, o_ref, *, matmul_dtype):
    """Chunked pass 2: out_chunk = p_chunk @ M."""
    p = p_ref[0].astype(matmul_dtype)                              # [t_hw, C]
    m = m_ref[0].astype(matmul_dtype)                              # [C, C]
    o_ref[0] = jnp.dot(p, m,
                       preferred_element_type=jnp.float32).astype(o_ref.dtype)


# ---------------------------------------------------------------------------
# Hardware query / block sizing
# ---------------------------------------------------------------------------

def _tpu_params():
    """(per-core VMEM bytes, TensorCores per chip) with safe fallbacks."""
    vmem_cap = 64 * 1024 * 1024          # conservative default (v7x per-core)
    num_cores = 1
    try:
        info = pltpu.get_tpu_info()
        for name in ("vmem_capacity_bytes", "vmem_bytes", "vmem_size_bytes"):
            v = getattr(info, name, None)
            if v:
                vmem_cap = int(v)
                break
        for name in ("num_cores", "tensor_cores_per_chip",
                     "num_tensorcores", "core_count"):
            v = getattr(info, name, None)
            if v:
                num_cores = int(v)
                break
    except Exception:
        pass
    return vmem_cap, num_cores


def _slab_io_bytes_per_batch(C, HW, in_isz, out_isz):
    """Double-buffered pipeline slabs (x, p, out) for one batch element."""
    c8, c128 = _round_up(C, 8), _round_up(C, 128)
    hw8, hw128 = _round_up(HW, 8), _round_up(HW, 128)
    x_t = c8 * hw128 * in_isz
    p_t = hw8 * c128 * in_isz
    o_t = hw8 * c128 * out_isz
    return 2 * (x_t + p_t + o_t)


def _fixed_overhead_bytes(C, HW, ID, mm_isz):
    """Resident weights (double-buffered) + in-kernel intermediates for ~one
    batch element (low-precision x/p copies, f32 out accumulator, a/h/m)."""
    c8, c128 = _round_up(C, 8), _round_up(C, 128)
    id8, id128 = _round_up(ID, 8), _round_up(ID, 128)
    hw8, hw128 = _round_up(HW, 8), _round_up(HW, 128)
    weights = 2 * 4 * (c8 * id128 + id8 * c128 + 8 * id128 + 8 * c128)
    inter = ((c8 * hw128 + hw8 * c128) * mm_isz       # low-precision x/p copies
             + hw8 * c128 * 4                          # f32 out before cast
             + (2 * c8 * c128 + c8 * id128) * 4)       # a, m, h
    return weights + 2 * inter                         # x2 slack for scheduler


def _pick_block_b(B, C, HW, ID, in_isz, out_isz, mm_isz, vmem_budget, num_cores):
    """Largest batch block fitting the budget; 0 means 'use HW-chunked path'."""
    per_b = _slab_io_bytes_per_batch(C, HW, in_isz, out_isz)
    avail = vmem_budget - _fixed_overhead_bytes(C, HW, ID, mm_isz)
    if avail < per_b:
        return 0
    cap = max(1, avail // per_b)
    # Only cap for grid-step count when there really are >=2 TensorCores.
    if num_cores >= 2 and B >= num_cores:
        target_steps = 2 * num_cores if B >= 2 * num_cores else num_cores
        cap = min(cap, max(1, B // target_steps))
    cap = min(cap, B, 64)                # 64: keep the unrolled body bounded
    bb = 1
    for d in range(1, int(cap) + 1):
        if B % d == 0:
            bb = d
    return bb


def _pick_hw_chunk(HW, C, in_isz, out_isz, vmem_budget):
    """Largest multiple-of-128 divisor of HW whose chunk fits the budget."""
    if HW % 128 != 0:
        return None
    c8, c128 = _round_up(C, 8), _round_up(C, 128)

    def chunk_bytes(t):
        x_t = c8 * t * in_isz
        p_t = _round_up(t, 8) * c128 * in_isz
        o_t = _round_up(t, 8) * c128 * out_isz
        return 2 * (x_t + p_t + o_t)

    best = None
    t = 128
    while t <= HW:
        if HW % t == 0 and chunk_bytes(t) <= int(0.6 * vmem_budget):
            best = t
        t += 128
    return best if best is not None else 128


# ---------------------------------------------------------------------------
# pallas_call wrappers
# ---------------------------------------------------------------------------

def _run_slab(xpl_flat, ppl_flat, w1t, b1_2d, w2t, b2_2d, *, block_b,
              matmul_dtype, out_dtype, inv_sqrt_hw, vmem_limit):
    B, C, HW = xpl_flat.shape
    ID = w1t.shape[1]
    grid = (B // block_b,)

    kernel = functools.partial(_dual_path_slab_kernel,
                               inv_sqrt_hw=inv_sqrt_hw,
                               matmul_dtype=matmul_dtype,
                               block_b=block_b)

    in_isz = jnp.dtype(xpl_flat.dtype).itemsize
    out_isz = jnp.dtype(out_dtype).itemsize
    flops = int(B * (4 * C * C * HW + 4 * C * C * ID))
    bytes_accessed = int(2 * B * C * HW * in_isz + B * HW * C * out_isz
                         + 4 * (2 * C * ID + ID + C))
    cost = pl.CostEstimate(flops=flops, transcendentals=0,
                           bytes_accessed=bytes_accessed)

    return pl.pallas_call(
        kernel,
        out_shape=jax.ShapeDtypeStruct((B, HW, C), out_dtype),
        grid_spec=pltpu.PrefetchScalarGridSpec(
            num_scalar_prefetch=0,
            grid=grid,
            in_specs=[
                pl.BlockSpec((block_b, C, HW), lambda i: (i, 0, 0)),
                pl.BlockSpec((block_b, HW, C), lambda i: (i, 0, 0)),
                # Constant index_maps: weights fetched once, kept resident.
                pl.BlockSpec((C, ID), lambda i: (0, 0)),
                pl.BlockSpec((1, ID), lambda i: (0, 0)),
                pl.BlockSpec((ID, C), lambda i: (0, 0)),
                pl.BlockSpec((1, C), lambda i: (0, 0)),
            ],
            # TODO(synk): [.., HW, C] is lane-sparse for C < 128 (masked
            # stores); lane-dense repacking deferred (see header).
            out_specs=pl.BlockSpec((block_b, HW, C), lambda i: (i, 0, 0)),
        ),
        compiler_params=pltpu.CompilerParams(
            dimension_semantics=("parallel",),
            vmem_limit_bytes=int(vmem_limit)),
        cost_estimate=cost,
    )(xpl_flat, ppl_flat, w1t, b1_2d, w2t, b2_2d)


def _run_chunked(xpl_flat, ppl_flat, w1t, b1_2d, w2t, b2_2d, *, hw_chunk,
                 matmul_dtype, out_dtype, inv_sqrt_hw, vmem_limit):
    B, C, HW = xpl_flat.shape
    ID = w1t.shape[1]
    assert HW % hw_chunk == 0, "hw_chunk must divide H*W"
    assert hw_chunk % 128 == 0 or hw_chunk == HW, "hw_chunk must be *128"
    n_hw = HW // hw_chunk

    # --- pass 1: M[b] = MLP(sum_k x_chunk @ p_chunk) / sqrt(HW) ------------
    kernel1 = functools.partial(_dual_path_m_kernel,
                                inv_sqrt_hw=inv_sqrt_hw,
                                matmul_dtype=matmul_dtype)
    m = pl.pallas_call(
        kernel1,
        out_shape=jax.ShapeDtypeStruct((B, C, C), jnp.float32),
        grid_spec=pltpu.PrefetchScalarGridSpec(
            num_scalar_prefetch=0,
            grid=(B, n_hw),
            in_specs=[
                pl.BlockSpec((1, C, hw_chunk), lambda b, k: (b, 0, k)),
                pl.BlockSpec((1, hw_chunk, C), lambda b, k: (b, k, 0)),
                pl.BlockSpec((C, ID), lambda b, k: (0, 0)),
                pl.BlockSpec((1, ID), lambda b, k: (0, 0)),
                pl.BlockSpec((ID, C), lambda b, k: (0, 0)),
                pl.BlockSpec((1, C), lambda b, k: (0, 0)),
            ],
            out_specs=pl.BlockSpec((1, C, C), lambda b, k: (b, 0, 0)),
            scratch_shapes=[pltpu.VMEM((C, C), jnp.float32)],
        ),
        compiler_params=pltpu.CompilerParams(
            dimension_semantics=("parallel", "arbitrary"),
            vmem_limit_bytes=int(vmem_limit)),
    )(xpl_flat, ppl_flat, w1t, b1_2d, w2t, b2_2d)

    # --- pass 2: out_chunk = p_chunk @ M[b] ---------------------------------
    kernel2 = functools.partial(_dual_path_apply_kernel,
                                matmul_dtype=matmul_dtype)
    return pl.pallas_call(
        kernel2,
        out_shape=jax.ShapeDtypeStruct((B, HW, C), out_dtype),
        grid_spec=pltpu.PrefetchScalarGridSpec(
            num_scalar_prefetch=0,
            grid=(B, n_hw),
            in_specs=[
                pl.BlockSpec((1, hw_chunk, C), lambda b, k: (b, k, 0)),
                pl.BlockSpec((1, C, C), lambda b, k: (b, 0, 0)),
            ],
            out_specs=pl.BlockSpec((1, hw_chunk, C), lambda b, k: (b, k, 0)),
        ),
        compiler_params=pltpu.CompilerParams(
            dimension_semantics=("parallel", "parallel"),
            vmem_limit_bytes=int(vmem_limit)),
    )(ppl_flat, m)


def dual_path_channel_attention(xpl, ppl, w1, b1, w2, b2, *, block_b=None,
                                hw_chunk=None, matmul_dtype=jnp.bfloat16,
                                out_dtype=None):
    """xpl, ppl: [B, C, H, W].  w1: [ID, C], b1: [ID], w2: [C, ID], b2: [C]
    (torch nn.Linear weight layout).  Returns [B, C, H, W].

    matmul_dtype: operand dtype for the large matmuls (accumulation is always
    f32); use jnp.float32 for bit-tight results.  out_dtype: output dtype
    (defaults to the input dtype; bf16 halves output HBM traffic).
    hw_chunk: force the HW-chunked two-pass path with this chunk size."""
    B, C, H, W = xpl.shape
    HW = H * W
    ID = w1.shape[0]
    out_dtype = jnp.dtype(xpl.dtype) if out_dtype is None else jnp.dtype(out_dtype)

    # Pure views (free reshapes), matching torch raw .view() semantics.
    xpl_flat = xpl.reshape(B, C, HW)
    ppl_flat = ppl.reshape(B, HW, C)
    w1t = w1.T                       # [C, ID]
    w2t = w2.T                       # [ID, C]
    b1_2d = b1.reshape(1, ID)
    b2_2d = b2.reshape(1, C)

    vmem_cap, num_cores = _tpu_params()
    vmem_budget = int(0.40 * vmem_cap)   # pipelined working-set budget
    vmem_limit = int(0.75 * vmem_cap)    # scoped-VMEM limit (leaves headroom)
    inv_sqrt_hw = 1.0 / math.sqrt(float(HW))

    in_isz = jnp.dtype(xpl.dtype).itemsize
    out_isz = jnp.dtype(out_dtype).itemsize
    mm_isz = jnp.dtype(matmul_dtype).itemsize

    common = dict(matmul_dtype=matmul_dtype, out_dtype=out_dtype,
                  inv_sqrt_hw=inv_sqrt_hw, vmem_limit=vmem_limit)

    if hw_chunk is not None:
        out_flat = _run_chunked(xpl_flat, ppl_flat, w1t, b1_2d, w2t, b2_2d,
                                hw_chunk=int(hw_chunk), **common)
        return out_flat.reshape(B, C, H, W)

    if block_b is None:
        block_b = _pick_block_b(B, C, HW, ID, in_isz, out_isz, mm_isz,
                                vmem_budget, num_cores)
        if block_b == 0:
            # Full slabs don't fit VMEM -> HW-chunked two-pass path.
            if HW % 128 == 0:
                auto_chunk = _pick_hw_chunk(HW, C, in_isz, out_isz, vmem_budget)
                out_flat = _run_chunked(xpl_flat, ppl_flat, w1t, b1_2d, w2t,
                                        b2_2d, hw_chunk=auto_chunk, **common)
                return out_flat.reshape(B, C, H, W)
            # TODO(synk): HW not a multiple of 128 -> no clean chunking; fall
            # back to best-effort single-batch slabs.
            block_b = 1
    assert B % block_b == 0, "block_b must divide B"
    out_flat = _run_slab(xpl_flat, ppl_flat, w1t, b1_2d, w2t, b2_2d,
                         block_b=block_b, **common)
    # Final torch .view(B, C, H, W) is a raw reshape of the [B, HW, C] buffer.
    return out_flat.reshape(B, C, H, W)


# ---------------------------------------------------------------------------
# Pure-JAX reference & self-test
# ---------------------------------------------------------------------------

def _reference(xpl, ppl, w1, b1, w2, b2):
    B, C, H, W = xpl.shape
    HW = H * W
    xpl_flat = xpl.reshape(B, C, HW)
    ppl_flat = ppl.reshape(B, HW, C)
    a = jnp.einsum('bch,bhd->bcd', xpl_flat, ppl_flat)
    h = jnp.maximum(jnp.einsum('bcd,id->bci', a, w1) + b1, 0.0)
    m = (jnp.einsum('bci,di->bcd', h, w2) + b2) / math.sqrt(float(HW))
    out = jnp.einsum('bhc,bcd->bhd', ppl_flat, m)
    return out.reshape(B, C, H, W)


if __name__ == "__main__":
    B, C, H, W = 2, 4, 16, 16
    expand_ratio = 3
    ID = C * expand_ratio

    key = jax.random.PRNGKey(0)
    k_x, k_p, k_w1, k_b1, k_w2, k_b2 = jax.random.split(key, 6)

    xpl = jax.random.normal(k_x, (B, C, H, W), dtype=jnp.float32)
    ppl = jax.random.normal(k_p, (B, C, H, W), dtype=jnp.float32)

    # Deterministic parameter init (torch-like uniform bounds), not a checkpoint.
    lim1 = 1.0 / math.sqrt(C)
    lim2 = 1.0 / math.sqrt(ID)
    w1 = jax.random.uniform(k_w1, (ID, C), minval=-lim1, maxval=lim1, dtype=jnp.float32)
    b1 = jax.random.uniform(k_b1, (ID,), minval=-lim1, maxval=lim1, dtype=jnp.float32)
    w2 = jax.random.uniform(k_w2, (C, ID), minval=-lim2, maxval=lim2, dtype=jnp.float32)
    b2 = jax.random.uniform(k_b2, (C,), minval=-lim2, maxval=lim2, dtype=jnp.float32)

    ref = _reference(xpl, ppl, w1, b1, w2, b2)

    # 1) Exact-precision slab path (f32 matmul operands) - tight check.
    out_f32 = jax.block_until_ready(
        dual_path_channel_attention(xpl, ppl, w1, b1, w2, b2,
                                    matmul_dtype=jnp.float32))
    assert out_f32.shape == (B, C, H, W)
    assert jnp.allclose(out_f32, ref, atol=1e-4, rtol=1e-4), "f32 slab mismatch"

    # 2) Default fast slab path (bf16 operands, f32 accumulation).
    out = jax.block_until_ready(dual_path_channel_attention(xpl, ppl, w1, b1, w2, b2))
    assert out.shape == (B, C, H, W)
    assert jnp.allclose(out, ref, atol=2e-2, rtol=2e-2), "bf16 slab mismatch"

    # 3) HW-chunked two-pass path (forced), exact precision.
    out_chunk = jax.block_until_ready(
        dual_path_channel_attention(xpl, ppl, w1, b1, w2, b2,
                                    hw_chunk=128, matmul_dtype=jnp.float32))
    assert out_chunk.shape == (B, C, H, W)
    assert jnp.allclose(out_chunk, ref, atol=1e-3, rtol=1e-3), "chunked mismatch"

    print("KERNEL_OK")
</pallas_src>

<mosaic_0001>
module attributes {stable_mosaic.version = 11 : i64} {
  func.func @_dual_path_slab_kernel(%arg0: i32, %arg1: memref<2x4x256xf32, #tpu.memory_space<vmem>>, %arg2: memref<2x256x4xf32, #tpu.memory_space<vmem>>, %arg3: memref<4x12xf32, #tpu.memory_space<vmem>>, %arg4: memref<1x12xf32, #tpu.memory_space<vmem>>, %arg5: memref<12x4xf32, #tpu.memory_space<vmem>>, %arg6: memref<1x4xf32, #tpu.memory_space<vmem>>, %arg7: memref<2x256x4xf32, #tpu.memory_space<vmem>>) attributes {dimension_semantics = [#tpu.dimension_semantics<parallel>], iteration_bounds = array<i64: 1>, scalar_prefetch = 0 : i64, scratch_operands = 0 : i64, tpu.core_type = #tpu.core_type<tc>, window_params = [{transform_indices = @transform_0, window_bounds = array<i64: 2, 4, 256>}, {transform_indices = @transform_1, window_bounds = array<i64: 2, 256, 4>}, {pipeline_mode = #tpu.pipeline_mode<synchronous>, transform_indices = @transform_2, window_bounds = array<i64: 4, 12>}, {pipeline_mode = #tpu.pipeline_mode<synchronous>, transform_indices = @transform_3, window_bounds = array<i64: 1, 12>}, {pipeline_mode = #tpu.pipeline_mode<synchronous>, transform_indices = @transform_4, window_bounds = array<i64: 12, 4>}, {pipeline_mode = #tpu.pipeline_mode<synchronous>, transform_indices = @transform_5, window_bounds = array<i64: 1, 4>}, {transform_indices = @transform_6, window_bounds = array<i64: 2, 256, 4>}]} {
    %c0 = arith.constant 0 : index
    %c0_0 = arith.constant 0 : index
    %0 = vector.load %arg3[%c0, %c0_0] : memref<4x12xf32, #tpu.memory_space<vmem>>, vector<4x12xf32>
    %c0_1 = arith.constant 0 : index
    %c0_2 = arith.constant 0 : index
    %1 = vector.load %arg5[%c0_1, %c0_2] : memref<12x4xf32, #tpu.memory_space<vmem>>, vector<12x4xf32>
    %c0_3 = arith.constant 0 : index
    %c0_4 = arith.constant 0 : index
    %2 = vector.load %arg4[%c0_3, %c0_4] : memref<1x12xf32, #tpu.memory_space<vmem>>, vector<1x12xf32>
    %c0_5 = arith.constant 0 : index
    %c0_6 = arith.constant 0 : index
    %3 = vector.load %arg6[%c0_5, %c0_6] : memref<1x4xf32, #tpu.memory_space<vmem>>, vector<1x4xf32>
    %c0_7 = arith.constant 0 : index
    %c0_8 = arith.constant 0 : index
    %c0_9 = arith.constant 0 : index
    %4 = vector.load %arg1[%c0_7, %c0_8, %c0_9] : memref<2x4x256xf32, #tpu.memory_space<vmem>>, vector<1x4x256xf32>
    %5 = vector.shape_cast %4 : vector<1x4x256xf32> to vector<4x256xf32>
    %c0_10 = arith.constant 0 : index
    %c0_11 = arith.constant 0 : index
    %c0_12 = arith.constant 0 : index
    %6 = vector.load %arg2[%c0_10, %c0_11, %c0_12] : memref<2x256x4xf32, #tpu.memory_space<vmem>>, vector<1x256x4xf32>
    %7 = vector.shape_cast %6 : vector<1x256x4xf32> to vector<256x4xf32>
    %cst = arith.constant dense<0.000000e+00> : vector<4x4xf32>
    %8 = tpu.matmul %5, %7, %cst {dimension_numbers = #tpu.dot_dimension_numbers<[1], [0], [0], [1], [0, 0, 1, 1], [], []>} : vector<4x256xf32>, vector<256x4xf32>, vector<4x4xf32> -> vector<4x4xf32>
    %cst_13 = arith.constant dense<0.000000e+00> : vector<4x12xf32>
    %9 = tpu.matmul %8, %0, %cst_13 {dimension_numbers = #tpu.dot_dimension_numbers<[1], [0], [0], [1], [0, 0, 1, 1], [], []>} : vector<4x4xf32>, vector<4x12xf32>, vector<4x12xf32> -> vector<4x12xf32>
    %10 = vector.broadcast %2 : vector<1x12xf32> to vector<4x12xf32>
    %11 = arith.addf %9, %10 : vector<4x12xf32>
    %cst_14 = arith.constant 0.000000e+00 : f32
    %12 = vector.broadcast %cst_14 : f32 to vector<4x12xf32>
    %13 = arith.maximumf %11, %12 : vector<4x12xf32>
    %cst_15 = arith.constant dense<0.000000e+00> : vector<4x4xf32>
    %14 = tpu.matmul %13, %1, %cst_15 {dimension_numbers = #tpu.dot_dimension_numbers<[1], [0], [0], [1], [0, 0, 1, 1], [], []>} : vector<4x12xf32>, vector<12x4xf32>, vector<4x4xf32> -> vector<4x4xf32>
    %15 = vector.broadcast %3 : vector<1x4xf32> to vector<4x4xf32>
    %16 = arith.addf %14, %15 : vector<4x4xf32>
    %cst_16 = arith.constant 6.250000e-02 : f32
    %17 = vector.broadcast %cst_16 : f32 to vector<4x4xf32>
    %18 = arith.mulf %16, %17 : vector<4x4xf32>
    %cst_17 = arith.constant dense<0.000000e+00> : vector<256x4xf32>
    %19 = tpu.matmul %7, %18, %cst_17 {dimension_numbers = #tpu.dot_dimension_numbers<[1], [0], [0], [1], [0, 0, 1, 1], [], []>} : vector<256x4xf32>, vector<4x4xf32>, vector<256x4xf32> -> vector<256x4xf32>
    %c0_18 = arith.constant 0 : index
    %c0_19 = arith.constant 0 : index
    %c0_20 = arith.constant 0 : index
    %20 = vector.load %arg7[%c0_18, %c0_19, %c0_20] : memref<2x256x4xf32, #tpu.memory_space<vmem>>, vector<1x256x4xf32>
    %21 = vector.shape_cast %20 : vector<1x256x4xf32> to vector<256x4xf32>
    %22 = vector.shape_cast %19 : vector<256x4xf32> to vector<1x256x4xf32>
    tpu.vector_store %arg7[%c0_18, %c0_19, %c0_20], %22 {strides = array<i32>} : memref<2x256x4xf32, #tpu.memory_space<vmem>>, vector<1x256x4xf32>,
    %c1 = arith.constant 1 : index
    %c0_21 = arith.constant 0 : index
    %c0_22 = arith.constant 0 : index
    %23 = vector.load %arg1[%c1, %c0_21, %c0_22] : memref<2x4x256xf32, #tpu.memory_space<vmem>>, vector<1x4x256xf32>
    %24 = vector.shape_cast %23 : vector<1x4x256xf32> to vector<4x256xf32>
    %c1_23 = arith.constant 1 : index
    %c0_24 = arith.constant 0 : index
    %c0_25 = arith.constant 0 : index
    %25 = vector.load %arg2[%c1_23, %c0_24, %c0_25] : memref<2x256x4xf32, #tpu.memory_space<vmem>>, vector<1x256x4xf32>
    %26 = vector.shape_cast %25 : vector<1x256x4xf32> to vector<256x4xf32>
    %cst_26 = arith.constant dense<0.000000e+00> : vector<4x4xf32>
    %27 = tpu.matmul %24, %26, %cst_26 {dimension_numbers = #tpu.dot_dimension_numbers<[1], [0], [0], [1], [0, 0, 1, 1], [], []>} : vector<4x256xf32>, vector<256x4xf32>, vector<4x4xf32> -> vector<4x4xf32>
    %cst_27 = arith.constant dense<0.000000e+00> : vector<4x12xf32>
    %28 = tpu.matmul %27, %0, %cst_27 {dimension_numbers = #tpu.dot_dimension_numbers<[1], [0], [0], [1], [0, 0, 1, 1], [], []>} : vector<4x4xf32>, vector<4x12xf32>, vector<4x12xf32> -> vector<4x12xf32>
    %29 = vector.broadcast %2 : vector<1x12xf32> to vector<4x12xf32>
    %30 = arith.addf %28, %29 : vector<4x12xf32>
    %cst_28 = arith.constant 0.000000e+00 : f32
    %31 = vector.broadcast %cst_28 : f32 to vector<4x12xf32>
    %32 = arith.maximumf %30, %31 : vector<4x12xf32>
    %cst_29 = arith.constant dense<0.000000e+00> : vector<4x4xf32>
    %33 = tpu.matmul %32, %1, %cst_29 {dimension_numbers = #tpu.dot_dimension_numbers<[1], [0], [0], [1], [0, 0, 1, 1], [], []>} : vector<4x12xf32>, vector<12x4xf32>, vector<4x4xf32> -> vector<4x4xf32>
    %34 = vector.broadcast %3 : vector<1x4xf32> to vector<4x4xf32>
    %35 = arith.addf %33, %34 : vector<4x4xf32>
    %cst_30 = arith.constant 6.250000e-02 : f32
    %36 = vector.broadcast %cst_30 : f32 to vector<4x4xf32>
    %37 = arith.mulf %35, %36 : vector<4x4xf32>
    %cst_31 = arith.constant dense<0.000000e+00> : vector<256x4xf32>
    %38 = tpu.matmul %26, %37, %cst_31 {dimension_numbers = #tpu.dot_dimension_numbers<[1], [0], [0], [1], [0, 0, 1, 1], [], []>} : vector<256x4xf32>, vector<4x4xf32>, vector<256x4xf32> -> vector<256x4xf32>
    %c1_32 = arith.constant 1 : index
    %c0_33 = arith.constant 0 : index
    %c0_34 = arith.constant 0 : index
    %39 = vector.load %arg7[%c1_32, %c0_33, %c0_34] : memref<2x256x4xf32, #tpu.memory_space<vmem>>, vector<1x256x4xf32>
    %40 = vector.shape_cast %39 : vector<1x256x4xf32> to vector<256x4xf32>
    %41 = vector.shape_cast %38 : vector<256x4xf32> to vector<1x256x4xf32>
    tpu.vector_store %arg7[%c1_32, %c0_33, %c0_34], %41 {strides = array<i32>} : memref<2x256x4xf32, #tpu.memory_space<vmem>>, vector<1x256x4xf32>,
    return
  }
  func.func @transform_0(%arg0: i32) -> (i32, i32, i32) {
    %c0_i32 = arith.constant 0 : i32
    %c0_i32_0 = arith.constant 0 : i32
    %c0_i32_1 = arith.constant 0 : i32
    return %arg0, %c0_i32, %c0_i32_0 : i32, i32, i32
  }
  func.func @transform_1(%arg0: i32) -> (i32, i32, i32) {
    %c0_i32 = arith.constant 0 : i32
    %c0_i32_0 = arith.constant 0 : i32
    %c0_i32_1 = arith.constant 0 : i32
    return %arg0, %c0_i32, %c0_i32_0 : i32, i32, i32
  }
  func.func @transform_2(%arg0: i32) -> (i32, i32) {
    %c0_i32 = arith.constant 0 : i32
    %c0_i32_0 = arith.constant 0 : i32
    %c0_i32_1 = arith.constant 0 : i32
    return %c0_i32, %c0_i32_0 : i32, i32
  }
  func.func @transform_3(%arg0: i32) -> (i32, i32) {
    %c0_i32 = arith.constant 0 : i32
    %c0_i32_0 = arith.constant 0 : i32
    %c0_i32_1 = arith.constant 0 : i32
    return %c0_i32, %c0_i32_0 : i32, i32
  }
  func.func @transform_4(%arg0: i32) -> (i32, i32) {
    %c0_i32 = arith.constant 0 : i32
    %c0_i32_0 = arith.constant 0 : i32
    %c0_i32_1 = arith.constant 0 : i32
    return %c0_i32, %c0_i32_0 : i32, i32
  }
  func.func @transform_5(%arg0: i32) -> (i32, i32) {
    %c0_i32 = arith.constant 0 : i32
    %c0_i32_0 = arith.constant 0 : i32
    %c0_i32_1 = arith.constant 0 : i32
    return %c0_i32, %c0_i32_0 : i32, i32
  }
  func.func @transform_6(%arg0: i32) -> (i32, i32, i32) {
    %c0_i32 = arith.constant 0 : i32
    %c0_i32_0 = arith.constant 0 : i32
    %c0_i32_1 = arith.constant 0 : i32
    return %arg0, %c0_i32, %c0_i32_0 : i32, i32, i32
  }
}

</mosaic_0001>

<llo_original>
// kernel: tpu_custom_call.1
$region0: #{tpu_custom_call.1}
  #allocation0 [shape = 'u32[]', space=smem, size = 0x4, offset = 0x4, fixed_abs, tag = 'smem constant byte address 0x4 - core index']
  #allocation1 [shape = 'u32[144,128]{1,0:T(1,128)}', space=vmem, size = 0x12000, scoped, tag = 'internal scratch']
  %s0 = inlined_call_operand.vmem [shape: f32[2,4,256], index: 0, kind: input, shape index: {}]
  %s1 = inlined_call_operand.vmem [shape: f32[2,256,4], index: 1, kind: input, shape index: {}]
  %s2 = inlined_call_operand.vmem [shape: f32[4,12], index: 2, kind: input, shape index: {}]
  %s3 = inlined_call_operand.vmem [shape: f32[1,12], index: 3, kind: input, shape index: {}]
  %s4 = inlined_call_operand.vmem [shape: f32[12,4], index: 4, kind: input, shape index: {}]
  %s5 = inlined_call_operand.vmem [shape: f32[1,4], index: 5, kind: input, shape index: {}]
  %s6 = inlined_call_operand.vmem [shape: f32[2,256,4], index: 6, kind: output, shape index: {}]
  %s7 = sld [smem:[#allocation0]]
  $region34: #{tpu_custom_call.1} parent=0
    _
  %s9 = ssub.s32 1, %s7
  %s10 = scalar_select 0, %s9, %s7
  // Predicated region
  $region2: #{tpu_custom_call.1} parent=0 // pred_check
    _
  $region3: #{tpu_custom_call.1} parent=0 // pred_check_branch
    %12 = sbr.rel (0) target = $region5
  $region4: #{tpu_custom_call.1} parent=0 // pred_region
    _
  $region5: #{tpu_custom_call.1} parent=0 // pred_fallthru
    _
  // Predicated region
  $region6: #{tpu_custom_call.1} parent=0 // pred_check
    _
  $region7: #{tpu_custom_call.1} parent=0 // pred_check_branch
    %14 = sbr.rel (0) target = $region9
  $region8: #{tpu_custom_call.1} parent=0 // pred_region
    _
  $region9: #{tpu_custom_call.1} parent=0 // pred_fallthru
    _
  // Predicated region
  $region10: #{tpu_custom_call.1} parent=0 // pred_check
    _
  $region11: #{tpu_custom_call.1} parent=0 // pred_check_branch
    %16 = sbr.rel (0) target = $region13
  $region12: #{tpu_custom_call.1} parent=0 // pred_region
    _
  $region13: #{tpu_custom_call.1} parent=0 // pred_fallthru
    _
  // Predicated region
  $region14: #{tpu_custom_call.1} parent=0 // pred_check
    _
  $region15: #{tpu_custom_call.1} parent=0 // pred_check_branch
    %18 = sbr.rel (0) target = $region17
  $region16: #{tpu_custom_call.1} parent=0 // pred_region
    _
  $region17: #{tpu_custom_call.1} parent=0 // pred_fallthru
    _
  // Predicated region
  $region18: #{tpu_custom_call.1} parent=0 // pred_check
    _
  $region19: #{tpu_custom_call.1} parent=0 // pred_check_branch
    %20 = sbr.rel (0) target = $region21
  $region20: #{tpu_custom_call.1} parent=0 // pred_region
    _
  $region21: #{tpu_custom_call.1} parent=0 // pred_fallthru
    _
  // Predicated region
  $region22: #{tpu_custom_call.1} parent=0 // pred_check
    _
  $region23: #{tpu_custom_call.1} parent=0 // pred_check_branch
    %22 = sbr.rel (0) target = $region25
  $region24: #{tpu_custom_call.1} parent=0 // pred_region
    _
  $region25: #{tpu_custom_call.1} parent=0 // pred_fallthru
    _
  %v23 = vld [vmem:[%s2] sm:$0xf]
  %v24 = vld [vmem:[%s4] sm:$0xff]
  %v25 = vld [vmem:[%s4 + $0x8] sm:$0xf]
  %v26 = vld [vmem:[%s3] sm:$0x1]
  %v27 = vld [vmem:[%s5] sm:$0x1]
  %v28 = vld [vmem:[%s0] sm:$0xff]
  %v29 = vld [vmem:[%s1] sm:$0xff]
  %v30 = vld [vmem:[%s1 + $0x8] sm:$0xff]
  %v31 = vld [vmem:[%s1 + $0x10] sm:$0xff]
  %v32 = vld [vmem:[%s1 + $0x18] sm:$0xff]
  %v33 = vld [vmem:[%s1 + $0x20] sm:$0xff]
  %v34 = vld [vmem:[%s1 + $0x28] sm:$0xff]
  %v35 = vld [vmem:[%s1 + $0x30] sm:$0xff]
  %v36 = vld [vmem:[%s1 + $0x38] sm:$0xff]
  %v37 = vld [vmem:[%s1 + $0x40] sm:$0xff]
  %v38 = vld [vmem:[%s1 + $0x48] sm:$0xff]
  %v39 = vld [vmem:[%s1 + $0x50] sm:$0xff]
  %v40 = vld [vmem:[%s1 + $0x58] sm:$0xff]
  %v41 = vld [vmem:[%s1 + $0x60] sm:$0xff]
  %v42 = vld [vmem:[%s1 + $0x68] sm:$0xff]
  %v43 = vld [vmem:[%s1 + $0x70] sm:$0xff]
  %v44 = vld [vmem:[%s1 + $0x78] sm:$0xff]
  %v45 = vld [vmem:[%s1 + $0x80] sm:$0xff]
  %v46 = vld [vmem:[%s1 + $0x88] sm:$0xff]
  %v47 = vld [vmem:[%s1 + $0x90] sm:$0xff]
  %v48 = vld [vmem:[%s1 + $0x98] sm:$0xff]
  %v49 = vld [vmem:[%s1 + $0xa0] sm:$0xff]
  %v50 = vld [vmem:[%s1 + $0xa8] sm:$0xff]
  %v51 = vld [vmem:[%s1 + $0xb0] sm:$0xff]
  %v52 = vld [vmem:[%s1 + $0xb8] sm:$0xff]
  %v53 = vld [vmem:[%s1 + $0xc0] sm:$0xff]
  %v54 = vld [vmem:[%s1 + $0xc8] sm:$0xff]
  %v55 = vld [vmem:[%s1 + $0xd0] sm:$0xff]
  %v56 = vld [vmem:[%s1 + $0xd8] sm:$0xff]
  %v57 = vld [vmem:[%s1 + $0xe0] sm:$0xff]
  %v58 = vld [vmem:[%s1 + $0xe8] sm:$0xff]
  %v59 = vld [vmem:[%s1 + $0xf0] sm:$0xff]
  %v60 = vld [vmem:[%s1 + $0xf8] sm:$0xff]
  %v62 = vcombine.high %v28, %v28
  %64 = vmatprep.subr.mxu0 0.0
  %65 = vmatpush1.msra.mxu0 %v44
  %66 = vmatprep.subr.mxu0 0.0
  %67 = vmatpush1.msra.mxu0 %v43
  %68 = vmatprep.subr.mxu0 0.0
  %69 = vmatpush1.msra.mxu0 %v42
  %70 = vmatprep.subr.mxu0 0.0
  %71 = vmatpush1.msra.mxu0 %v41
  %72 = vmatprep.subr.mxu0 0.0
  %73 = vmatpush1.msra.mxu0 %v40
  %74 = vmatprep.subr.mxu0 0.0
  %75 = vmatpush1.msra.mxu0 %v39
  %76 = vmatprep.subr.mxu0 0.0
  %77 = vmatpush1.msra.mxu0 %v38
  %78 = vmatprep.subr.mxu0 0.0
  %79 = vmatpush1.msra.mxu0 %v37
  %80 = vmatprep.subr.mxu0 0.0
  %81 = vmatpush1.msra.mxu0 %v36
  %82 = vmatprep.subr.mxu0 0.0
  %83 = vmatpush1.msra.mxu0 %v35
  %84 = vmatprep.subr.mxu0 0.0
  %85 = vmatpush1.msra.mxu0 %v34
  %86 = vmatprep.subr.mxu0 0.0
  %87 = vmatpush1.msra.mxu0 %v33
  %88 = vmatprep.subr.mxu0 0.0
  %89 = vmatpush1.msra.mxu0 %v32
  %90 = vmatprep.subr.mxu0 0.0
  %91 = vmatpush1.msra.mxu0 %v31
  %92 = vmatprep.subr.mxu0 0.0
  %93 = vmatpush1.msra.mxu0 %v30
  %94 = vmatprep.subr.mxu0 0.0
  %95 = vmatpush1.msra.mxu0 %v29
  %96 = vmatprep.subr.mxu0 0.0
  %97 = vmatpush2.msra.mxu0 %v60
  %98 = vmatprep.subr.mxu0 0.0
  %99 = vmatpush2.msra.mxu0 %v59
  %100 = vmatprep.subr.mxu0 0.0
  %101 = vmatpush2.msra.mxu0 %v58
  %102 = vmatprep.subr.mxu0 0.0
  %103 = vmatpush2.msra.mxu0 %v57
  %104 = vmatprep.subr.mxu0 0.0
  %105 = vmatpush2.msra.mxu0 %v56
  %106 = vmatprep.subr.mxu0 0.0
  %107 = vmatpush2.msra.mxu0 %v55
  %108 = vmatprep.subr.mxu0 0.0
  %109 = vmatpush2.msra.mxu0 %v54
  %110 = vmatprep.subr.mxu0 0.0
  %111 = vmatpush2.msra.mxu0 %v53
  %112 = vmatprep.subr.mxu0 0.0
  %113 = vmatpush2.msra.mxu0 %v52
  %114 = vmatprep.subr.mxu0 0.0
  %115 = vmatpush2.msra.mxu0 %v51
  %116 = vmatprep.subr.mxu0 0.0
  %117 = vmatpush2.msra.mxu0 %v50
  %118 = vmatprep.subr.mxu0 0.0
  %119 = vmatpush2.msra.mxu0 %v49
  %120 = vmatprep.subr.mxu0 0.0
  %121 = vmatpush2.msra.mxu0 %v48
  %122 = vmatprep.subr.mxu0 0.0
  %123 = vmatpush2.msra.mxu0 %v47
  %124 = vmatprep.subr.mxu0 0.0
  %125 = vmatpush2.msra.mxu0 %v46
  %126 = vmatprep.subr.mxu0 0.0
  %127 = vmatpush2.msra.mxu0 %v45
  %128 = vmatprep.mubr.f32.mxu0 %v62
  %129 = vmatmul.mubr.f32.gmra.mxu0 %v28
  %v130 = vpop.f32.mrf.mxu0
  %v131 = vadd.f32 0.0, %v130
  %v132 = vpop.f32.mrf.mxu0
  %133 = vdwg.mxu0
  %v135 = vlaneseq
  %v136 = vshrl.u32 %v135, 7
  %v137 = vsub.s32 0, %v136
  %v138 = vrot.slane %v26, %v137
  %vm140 = vcmask 31744
  %v142 = vsel %vm140, %v131, 0
  %vm144 = vcmask 1043456
  %v146 = vsel %vm144, %v23, 0
  %148 = vmatprep.subr.mxu0 0.0
  %149 = vmatpush1.msra.mxu0 0.0
  %150 = vmatprep.subr.mxu0 0.0
  %151 = vmatpush1.msra.mxu0 0.0
  %152 = vmatprep.subr.mxu0 0.0
  %153 = vmatpush1.msra.mxu0 0.0
  %154 = vmatprep.subr.mxu0 0.0
  %155 = vmatpush1.msra.mxu0 0.0
  %156 = vmatprep.subr.mxu0 0.0
  %157 = vmatpush1.msra.mxu0 0.0
  %158 = vmatprep.subr.mxu0 0.0
  %159 = vmatpush1.msra.mxu0 0.0
  %160 = vmatprep.subr.mxu0 0.0
  %161 = vmatpush1.msra.mxu0 0.0
  %162 = vmatprep.subr.mxu0 0.0
  %163 = vmatpush1.msra.mxu0 0.0
  %164 = vmatprep.subr.mxu0 0.0
  %165 = vmatpush1.msra.mxu0 0.0
  %166 = vmatprep.subr.mxu0 0.0
  %167 = vmatpush1.msra.mxu0 0.0
  %168 = vmatprep.subr.mxu0 0.0
  %169 = vmatpush1.msra.mxu0 0.0
  %170 = vmatprep.subr.mxu0 0.0
  %171 = vmatpush1.msra.mxu0 0.0
  %172 = vmatprep.subr.mxu0 0.0
  %173 = vmatpush1.msra.mxu0 0.0
  %174 = vmatprep.subr.mxu0 0.0
  %175 = vmatpush1.msra.mxu0 0.0
  %176 = vmatprep.subr.mxu0 0.0
  %177 = vmatpush1.msra.mxu0 0.0
  %178 = vmatprep.subr.mxu0 0.0
  %179 = vmatpush1.msra.mxu0 %v146
  %180 = vmatprep.subr.mxu0 0.0
  %181 = vmatpush2.msra.mxu0 0.0
  %182 = vmatprep.subr.mxu0 0.0
  %183 = vmatpush2.msra.mxu0 0.0
  %184 = vmatprep.subr.mxu0 0.0
  %185 = vmatpush2.msra.mxu0 0.0
  %186 = vmatprep.subr.mxu0 0.0
  %187 = vmatpush2.msra.mxu0 0.0
  %188 = vmatprep.subr.mxu0 0.0
  %189 = vmatpush2.msra.mxu0 0.0
  %190 = vmatprep.subr.mxu0 0.0
  %191 = vmatpush2.msra.mxu0 0.0
  %192 = vmatprep.subr.mxu0 0.0
  %193 = vmatpush2.msra.mxu0 0.0
  %194 = vmatprep.subr.mxu0 0.0
  %195 = vmatpush2.msra.mxu0 0.0
  %196 = vmatprep.subr.mxu0 0.0
  %197 = vmatpush2.msra.mxu0 0.0
  %198 = vmatprep.subr.mxu0 0.0
  %199 = vmatpush2.msra.mxu0 0.0
  %200 = vmatprep.subr.mxu0 0.0
  %201 = vmatpush2.msra.mxu0 0.0
  %202 = vmatprep.subr.mxu0 0.0
  %203 = vmatpush2.msra.mxu0 0.0
  %204 = vmatprep.subr.mxu0 0.0
  %205 = vmatpush2.msra.mxu0 0.0
  %206 = vmatprep.subr.mxu0 0.0
  %207 = vmatpush2.msra.mxu0 0.0
  %208 = vmatprep.subr.mxu0 0.0
  %209 = vmatpush2.msra.mxu0 0.0
  %210 = vmatprep.subr.mxu0 0.0
  %211 = vmatpush2.msra.mxu0 0.0
  %212 = vmatprep.mubr.f32.mxu0 0.0
  %213 = vmatmul.mubr.f32.gmra.mxu0 %v142
  %v214 = vpop.f32.mrf.mxu0
  %v215 = vadd.f32 %v138, %v214
  %v216 = vpop.f32.mrf.mxu0
  %217 = vdwg.mxu0
  %v218 = vmax.f32 %v215, 0.0
  %v220 = vlaneseq
  %v221 = vshrl.u32 %v220, 7
  %v222 = vsub.s32 0, %v221
  %v223 = vrot.slane %v27, %v222
  %vm225 = vcmask 97280
  %v227 = vsel %vm225, %v218, 0
  %v230 = vsel %vm144, %v25, 0
  %232 = vmatprep.subr.mxu0 0.0
  %233 = vmatpush1.msra.mxu0 0.0
  %234 = vmatprep.subr.mxu0 0.0
  %235 = vmatpush1.msra.mxu0 0.0
  %236 = vmatprep.subr.mxu0 0.0
  %237 = vmatpush1.msra.mxu0 0.0
  %238 = vmatprep.subr.mxu0 0.0
  %239 = vmatpush1.msra.mxu0 0.0
  %240 = vmatprep.subr.mxu0 0.0
  %241 = vmatpush1.msra.mxu0 0.0
  %242 = vmatprep.subr.mxu0 0.0
  %243 = vmatpush1.msra.mxu0 0.0
  %244 = vmatprep.subr.mxu0 0.0
  %245 = vmatpush1.msra.mxu0 0.0
  %246 = vmatprep.subr.mxu0 0.0
  %247 = vmatpush1.msra.mxu0 0.0
  %248 = vmatprep.subr.mxu0 0.0
  %249 = vmatpush1.msra.mxu0 0.0
  %250 = vmatprep.subr.mxu0 0.0
  %251 = vmatpush1.msra.mxu0 0.0
  %252 = vmatprep.subr.mxu0 0.0
  %253 = vmatpush1.msra.mxu0 0.0
  %254 = vmatprep.subr.mxu0 0.0
  %255 = vmatpush1.msra.mxu0 0.0
  %256 = vmatprep.subr.mxu0 0.0
  %257 = vmatpush1.msra.mxu0 0.0
  %258 = vmatprep.subr.mxu0 0.0
  %259 = vmatpush1.msra.mxu0 0.0
  %260 = vmatprep.subr.mxu0 0.0
  %261 = vmatpush1.msra.mxu0 %v230
  %262 = vmatprep.subr.mxu0 0.0
  %263 = vmatpush1.msra.mxu0 %v24
  %264 = vmatprep.subr.mxu0 0.0
  %265 = vmatpush2.msra.mxu0 0.0
  %266 = vmatprep.subr.mxu0 0.0
  %267 = vmatpush2.msra.mxu0 0.0
  %268 = vmatprep.subr.mxu0 0.0
  %269 = vmatpush2.msra.mxu0 0.0
  %270 = vmatprep.subr.mxu0 0.0
  %271 = vmatpush2.msra.mxu0 0.0
  %272 = vmatprep.subr.mxu0 0.0
  %273 = vmatpush2.msra.mxu0 0.0
  %274 = vmatprep.subr.mxu0 0.0
  %275 = vmatpush2.msra.mxu0 0.0
  %276 = vmatprep.subr.mxu0 0.0
  %277 = vmatpush2.msra.mxu0 0.0
  %278 = vmatprep.subr.mxu0 0.0
  %279 = vmatpush2.msra.mxu0 0.0
  %280 = vmatprep.subr.mxu0 0.0
  %281 = vmatpush2.msra.mxu0 0.0
  %282 = vmatprep.subr.mxu0 0.0
  %283 = vmatpush2.msra.mxu0 0.0
  %284 = vmatprep.subr.mxu0 0.0
  %285 = vmatpush2.msra.mxu0 0.0
  %286 = vmatprep.subr.mxu0 0.0
  %287 = vmatpush2.msra.mxu0 0.0
  %288 = vmatprep.subr.mxu0 0.0
  %289 = vmatpush2.msra.mxu0 0.0
  %290 = vmatprep.subr.mxu0 0.0
  %291 = vmatpush2.msra.mxu0 0.0
  %292 = vmatprep.subr.mxu0 0.0
  %293 = vmatpush2.msra.mxu0 0.0
  %294 = vmatprep.subr.mxu0 0.0
  %295 = vmatpush2.msra.mxu0 0.0
  %296 = vmatprep.mubr.f32.mxu0 0.0
  %297 = vmatmul.mubr.f32.gmra.mxu0 %v227
  %v298 = vpop.f32.mrf.mxu0
  %v299 = vadd.f32 %v223, %v298
  %v300 = vpop.f32.mrf.mxu0
  %301 = vdwg.mxu0
  %v302 = vmul.f32 %v299, 0.0625
  %v304 = vsel %vm140, %v29, 0
  %v307 = vsel %vm140, %v30, 0
  %v310 = vsel %vm140, %v31, 0
  %v313 = vsel %vm140, %v32, 0
  %v316 = vsel %vm140, %v33, 0
  %v319 = vsel %vm140, %v34, 0
  %v322 = vsel %vm140, %v35, 0
  %v325 = vsel %vm140, %v36, 0
  %v328 = vsel %vm140, %v37, 0
  %v331 = vsel %vm140, %v38, 0
  %v334 = vsel %vm140, %v39, 0
  %v337 = vsel %vm140, %v40, 0
  %v340 = vsel %vm140, %v41, 0
  %v343 = vsel %vm140, %v42, 0
  %v346 = vsel %vm140, %v43, 0
  %v349 = vsel %vm140, %v44, 0
  %v352 = vsel %vm140, %v45, 0
  %v355 = vsel %vm140, %v46, 0
  %v358 = vsel %vm140, %v47, 0
  %v361 = vsel %vm140, %v48, 0
  %v364 = vsel %vm140, %v49, 0
  %v367 = vsel %vm140, %v50, 0
  %v370 = vsel %vm140, %v51, 0
  %v373 = vsel %vm140, %v52, 0
  %v376 = vsel %vm140, %v53, 0
  %v379 = vsel %vm140, %v54, 0
  %v382 = vsel %vm140, %v55, 0
  %v385 = vsel %vm140, %v56, 0
  %v388 = vsel %vm140, %v57, 0
  %v391 = vsel %vm140, %v58, 0
  %v394 = vsel %vm140, %v59, 0
  %v397 = vsel %vm140, %v60, 0
  %v400 = vsel %vm144, %v302, 0
  %402 = vmatprep.subr.mxu0 0.0
  %403 = vmatpush1.msra.mxu0 0.0
  %404 = vmatprep.subr.mxu0 0.0
  %405 = vmatpush1.msra.mxu0 0.0
  %406 = vmatprep.subr.mxu0 0.0
  %407 = vmatpush1.msra.mxu0 0.0
  %408 = vmatprep.subr.mxu0 0.0
  %409 = vmatpush1.msra.mxu0 0.0
  %410 = vmatprep.subr.mxu0 0.0
  %411 = vmatpush1.msra.mxu0 0.0
  %412 = vmatprep.subr.mxu0 0.0
  %413 = vmatpush1.msra.mxu0 0.0
  %414 = vmatprep.subr.mxu0 0.0
  %415 = vmatpush1.msra.mxu0 0.0
  %416 = vmatprep.subr.mxu0 0.0
  %417 = vmatpush1.msra.mxu0 0.0
  %418 = vmatprep.subr.mxu0 0.0
  %419 = vmatpush1.msra.mxu0 0.0
  %420 = vmatprep.subr.mxu0 0.0
  %421 = vmatpush1.msra.mxu0 0.0
  %422 = vmatprep.subr.mxu0 0.0
  %423 = vmatpush1.msra.mxu0 0.0
  %424 = vmatprep.subr.mxu0 0.0
  %425 = vmatpush1.msra.mxu0 0.0
  %426 = vmatprep.subr.mxu0 0.0
  %427 = vmatpush1.msra.mxu0 0.0
  %428 = vmatprep.subr.mxu0 0.0
  %429 = vmatpush1.msra.mxu0 0.0
  %430 = vmatprep.subr.mxu0 0.0
  %431 = vmatpush1.msra.mxu0 0.0
  %432 = vmatprep.subr.mxu0 0.0
  %433 = vmatpush1.msra.mxu0 %v400
  %434 = vmatprep.subr.mxu0 0.0
  %435 = vmatpush2.msra.mxu0 0.0
  %436 = vmatprep.subr.mxu0 0.0
  %437 = vmatpush2.msra.mxu0 0.0
  %438 = vmatprep.subr.mxu0 0.0
  %439 = vmatpush2.msra.mxu0 0.0
  %440 = vmatprep.subr.mxu0 0.0
  %441 = vmatpush2.msra.mxu0 0.0
  %442 = vmatprep.subr.mxu0 0.0
  %443 = vmatpush2.msra.mxu0 0.0
  %444 = vmatprep.subr.mxu0 0.0
  %445 = vmatpush2.msra.mxu0 0.0
  %446 = vmatprep.subr.mxu0 0.0
  %447 = vmatpush2.msra.mxu0 0.0
  %448 = vmatprep.subr.mxu0 0.0
  %449 = vmatpush2.msra.mxu0 0.0
  %450 = vmatprep.subr.mxu0 0.0
  %451 = vmatpush2.msra.mxu0 0.0
  %452 = vmatprep.subr.mxu0 0.0
  %453 = vmatpush2.msra.mxu0 0.0
  %454 = vmatprep.subr.mxu0 0.0
  %455 = vmatpush2.msra.mxu0 0.0
  %456 = vmatprep.subr.mxu0 0.0
  %457 = vmatpush2.msra.mxu0 0.0
  %458 = vmatprep.subr.mxu0 0.0
  %459 = vmatpush2.msra.mxu0 0.0
  %460 = vmatprep.subr.mxu0 0.0
  %461 = vmatpush2.msra.mxu0 0.0
  %462 = vmatprep.subr.mxu0 0.0
  %463 = vmatpush2.msra.mxu0 0.0
  %464 = vmatprep.subr.mxu0 0.0
  %465 = vmatpush2.msra.mxu0 0.0
  %466 = vmatprep.mubr.f32.mxu0 0.0
  %467 = vmatmul.mubr.f32.gmra.mxu0 %v304
  %v468 = vpop.f32.mrf.mxu0
  %v469 = vadd.f32 0.0, %v468
  %v470 = vpop.f32.mrf.mxu0
  %471 = vmatprep.mubr.f32.mxu0 0.0
  %472 = vmatmul.mubr.f32.gmra.mxu0 %v307
  %v473 = vpop.f32.mrf.mxu0
  %v474 = vadd.f32 0.0, %v473
  %v475 = vpop.f32.mrf.mxu0
  %476 = vmatprep.mubr.f32.mxu0 0.0
  %477 = vmatmul.mubr.f32.gmra.mxu0 %v310
  %v478 = vpop.f32.mrf.mxu0
  %v479 = vadd.f32 0.0, %v478
  %v480 = vpop.f32.mrf.mxu0
  %481 = vmatprep.mubr.f32.mxu0 0.0
  %482 = vmatmul.mubr.f32.gmra.mxu0 %v313
  %v483 = vpop.f32.mrf.mxu0
  %v484 = vadd.f32 0.0, %v483
  %v485 = vpop.f32.mrf.mxu0
  %486 = vmatprep.mubr.f32.mxu0 0.0
  %487 = vmatmul.mubr.f32.gmra.mxu0 %v316
  %v488 = vpop.f32.mrf.mxu0
  %v489 = vadd.f32 0.0, %v488
  %v490 = vpop.f32.mrf.mxu0
  %491 = vmatprep.mubr.f32.mxu0 0.0
  %492 = vmatmul.mubr.f32.gmra.mxu0 %v319
  %v493 = vpop.f32.mrf.mxu0
  %v494 = vadd.f32 0.0, %v493
  %v495 = vpop.f32.mrf.mxu0
  %496 = vmatprep.mubr.f32.mxu0 0.0
  %497 = vmatmul.mubr.f32.gmra.mxu0 %v322
  %v498 = vpop.f32.mrf.mxu0
  %v499 = vadd.f32 0.0, %v498
  %v500 = vpop.f32.mrf.mxu0
  %501 = vmatprep.mubr.f32.mxu0 0.0
  %502 = vmatmul.mubr.f32.gmra.mxu0 %v325
  %v503 = vpop.f32.mrf.mxu0
  %v504 = vadd.f32 0.0, %v503
  %v505 = vpop.f32.mrf.mxu0
  %506 = vmatprep.mubr.f32.mxu0 0.0
  %507 = vmatmul.mubr.f32.gmra.mxu0 %v328
  %v508 = vpop.f32.mrf.mxu0
  %v509 = vadd.f32 0.0, %v508
  %v510 = vpop.f32.mrf.mxu0
  %511 = vmatprep.mubr.f32.mxu0 0.0
  %512 = vmatmul.mubr.f32.gmra.mxu0 %v331
  %v513 = vpop.f32.mrf.mxu0
  %v514 = vadd.f32 0.0, %v513
  %v515 = vpop.f32.mrf.mxu0
  %516 = vmatprep.mubr.f32.mxu0 0.0
  %517 = vmatmul.mubr.f32.gmra.mxu0 %v334
  %v518 = vpop.f32.mrf.mxu0
  %v519 = vadd.f32 0.0, %v518
  %v520 = vpop.f32.mrf.mxu0
  %521 = vmatprep.mubr.f32.mxu0 0.0
  %522 = vmatmul.mubr.f32.gmra.mxu0 %v337
  %v523 = vpop.f32.mrf.mxu0
  %v524 = vadd.f32 0.0, %v523
  %v525 = vpop.f32.mrf.mxu0
  %526 = vmatprep.mubr.f32.mxu0 0.0
  %527 = vmatmul.mubr.f32.gmra.mxu0 %v340
  %v528 = vpop.f32.mrf.mxu0
  %v529 = vadd.f32 0.0, %v528
  %v530 = vpop.f32.mrf.mxu0
  %531 = vmatprep.mubr.f32.mxu0 0.0
  %532 = vmatmul.mubr.f32.gmra.mxu0 %v343
  %v533 = vpop.f32.mrf.mxu0
  %v534 = vadd.f32 0.0, %v533
  %v535 = vpop.f32.mrf.mxu0
  %536 = vmatprep.mubr.f32.mxu0 0.0
  %537 = vmatmul.mubr.f32.gmra.mxu0 %v346
  %v538 = vpop.f32.mrf.mxu0
  %v539 = vadd.f32 0.0, %v538
  %v540 = vpop.f32.mrf.mxu0
  %541 = vmatprep.mubr.f32.mxu0 0.0
  %542 = vmatmul.mubr.f32.gmra.mxu0 %v349
  %v543 = vpop.f32.mrf.mxu0
  %v544 = vadd.f32 0.0, %v543
  %v545 = vpop.f32.mrf.mxu0
  %546 = vmatprep.mubr.f32.mxu0 0.0
  %547 = vmatmul.mubr.f32.gmra.mxu0 %v352
  %v548 = vpop.f32.mrf.mxu0
  %v549 = vadd.f32 0.0, %v548
  %v550 = vpop.f32.mrf.mxu0
  %551 = vmatprep.mubr.f32.mxu0 0.0
  %552 = vmatmul.mubr.f32.gmra.mxu0 %v355
  %v553 = vpop.f32.mrf.mxu0
  %v554 = vadd.f32 0.0, %v553
  %v555 = vpop.f32.mrf.mxu0
  %556 = vmatprep.mubr.f32.mxu0 0.0
  %557 = vmatmul.mubr.f32.gmra.mxu0 %v358
  %v558 = vpop.f32.mrf.mxu0
  %v559 = vadd.f32 0.0, %v558
  %v560 = vpop.f32.mrf.mxu0
  %561 = vmatprep.mubr.f32.mxu0 0.0
  %562 = vmatmul.mubr.f32.gmra.mxu0 %v361
  %v563 = vpop.f32.mrf.mxu0
  %v564 = vadd.f32 0.0, %v563
  %v565 = vpop.f32.mrf.mxu0
  %566 = vmatprep.mubr.f32.mxu0 0.0
  %567 = vmatmul.mubr.f32.gmra.mxu0 %v364
  %v568 = vpop.f32.mrf.mxu0
  %v569 = vadd.f32 0.0, %v568
  %v570 = vpop.f32.mrf.mxu0
  %571 = vmatprep.mubr.f32.mxu0 0.0
  %572 = vmatmul.mubr.f32.gmra.mxu0 %v367
  %v573 = vpop.f32.mrf.mxu0
  %v574 = vadd.f32 0.0, %v573
  %v575 = vpop.f32.mrf.mxu0
  %576 = vmatprep.mubr.f32.mxu0 0.0
  %577 = vmatmul.mubr.f32.gmra.mxu0 %v370
  %v578 = vpop.f32.mrf.mxu0
  %v579 = vadd.f32 0.0, %v578
  %v580 = vpop.f32.mrf.mxu0
  %581 = vmatprep.mubr.f32.mxu0 0.0
  %582 = vmatmul.mubr.f32.gmra.mxu0 %v373
  %v583 = vpop.f32.mrf.mxu0
  %v584 = vadd.f32 0.0, %v583
  %v585 = vpop.f32.mrf.mxu0
  %586 = vmatprep.mubr.f32.mxu0 0.0
  %587 = vmatmul.mubr.f32.gmra.mxu0 %v376
  %v588 = vpop.f32.mrf.mxu0
  %v589 = vadd.f32 0.0, %v588
  %v590 = vpop.f32.mrf.mxu0
  %591 = vmatprep.mubr.f32.mxu0 0.0
  %592 = vmatmul.mubr.f32.gmra.mxu0 %v379
  %v593 = vpop.f32.mrf.mxu0
  %v594 = vadd.f32 0.0, %v593
  %v595 = vpop.f32.mrf.mxu0
  %596 = vmatprep.mubr.f32.mxu0 0.0
  %597 = vmatmul.mubr.f32.gmra.mxu0 %v382
  %v598 = vpop.f32.mrf.mxu0
  %v599 = vadd.f32 0.0, %v598
  %v600 = vpop.f32.mrf.mxu0
  %601 = vmatprep.mubr.f32.mxu0 0.0
  %602 = vmatmul.mubr.f32.gmra.mxu0 %v385
  %v603 = vpop.f32.mrf.mxu0
  %v604 = vadd.f32 0.0, %v603
  %v605 = vpop.f32.mrf.mxu0
  %606 = vmatprep.mubr.f32.mxu0 0.0
  %607 = vmatmul.mubr.f32.gmra.mxu0 %v388
  %v608 = vpop.f32.mrf.mxu0
  %v609 = vadd.f32 0.0, %v608
  %v610 = vpop.f32.mrf.mxu0
  %611 = vmatprep.mubr.f32.mxu0 0.0
  %612 = vmatmul.mubr.f32.gmra.mxu0 %v391
  %v613 = vpop.f32.mrf.mxu0
  %v614 = vadd.f32 0.0, %v613
  %v615 = vpop.f32.mrf.mxu0
  %616 = vmatprep.mubr.f32.mxu0 0.0
  %617 = vmatmul.mubr.f32.gmra.mxu0 %v394
  %v618 = vpop.f32.mrf.mxu0
  %v619 = vadd.f32 0.0, %v618
  %v620 = vpop.f32.mrf.mxu0
  %621 = vmatprep.mubr.f32.mxu0 0.0
  %622 = vmatmul.mubr.f32.gmra.mxu0 %v397
  %v623 = vpop.f32.mrf.mxu0
  %v624 = vadd.f32 0.0, %v623
  %v625 = vpop.f32.mrf.mxu0
  %626 = vdwg.mxu0
  %627 = vst.msk [vmem:[%s6] sm:$0xff] %vm140, %v469
  %628 = vst.msk [vmem:[%s6 + $0x8] sm:$0xff] %vm140, %v474
  %629 = vst.msk [vmem:[%s6 + $0x10] sm:$0xff] %vm140, %v479
  %630 = vst.msk [vmem:[%s6 + $0x18] sm:$0xff] %vm140, %v484
  %631 = vst.msk [vmem:[%s6 + $0x20] sm:$0xff] %vm140, %v489
  %632 = vst.msk [vmem:[%s6 + $0x28] sm:$0xff] %vm140, %v494
  %633 = vst.msk [vmem:[%s6 + $0x30] sm:$0xff] %vm140, %v499
  %634 = vst.msk [vmem:[%s6 + $0x38] sm:$0xff] %vm140, %v504
  %635 = vst.msk [vmem:[%s6 + $0x40] sm:$0xff] %vm140, %v509
  %636 = vst.msk [vmem:[%s6 + $0x48] sm:$0xff] %vm140, %v514
  %637 = vst.msk [vmem:[%s6 + $0x50] sm:$0xff] %vm140, %v519
  %638 = vst.msk [vmem:[%s6 + $0x58] sm:$0xff] %vm140, %v524
  %639 = vst.msk [vmem:[%s6 + $0x60] sm:$0xff] %vm140, %v529
  %640 = vst.msk [vmem:[%s6 + $0x68] sm:$0xff] %vm140, %v534
  %641 = vst.msk [vmem:[%s6 + $0x70] sm:$0xff] %vm140, %v539
  %642 = vst.msk [vmem:[%s6 + $0x78] sm:$0xff] %vm140, %v544
  %643 = vst.msk [vmem:[%s6 + $0x80] sm:$0xff] %vm140, %v549
  %644 = vst.msk [vmem:[%s6 + $0x88] sm:$0xff] %vm140, %v554
  %645 = vst.msk [vmem:[%s6 + $0x90] sm:$0xff] %vm140, %v559
  %646 = vst.msk [vmem:[%s6 + $0x98] sm:$0xff] %vm140, %v564
  %647 = vst.msk [vmem:[%s6 + $0xa0] sm:$0xff] %vm140, %v569
  %648 = vst.msk [vmem:[%s6 + $0xa8] sm:$0xff] %vm140, %v574
  %649 = vst.msk [vmem:[%s6 + $0xb0] sm:$0xff] %vm140, %v579
  %650 = vst.msk [vmem:[%s6 + $0xb8] sm:$0xff] %vm140, %v584
  %651 = vst.msk [vmem:[%s6 + $0xc0] sm:$0xff] %vm140, %v589
  %652 = vst.msk [vmem:[%s6 + $0xc8] sm:$0xff] %vm140, %v594
  %653 = vst.msk [vmem:[%s6 + $0xd0] sm:$0xff] %vm140, %v599
  %654 = vst.msk [vmem:[%s6 + $0xd8] sm:$0xff] %vm140, %v604
  %655 = vst.msk [vmem:[%s6 + $0xe0] sm:$0xff] %vm140, %v609
  %656 = vst.msk [vmem:[%s6 + $0xe8] sm:$0xff] %vm140, %v614
  %657 = vst.msk [vmem:[%s6 + $0xf0] sm:$0xff] %vm140, %v619
  %658 = vst.msk [vmem:[%s6 + $0xf8] sm:$0xff] %vm140, %v624
  %s659 = scalar_lea.vmem %s0, 8
  %v660 = vld [vmem:[%s659] sm:$0xff]
  %s661 = scalar_lea.vmem %s1, 256
  %v662 = vld [vmem:[%s661] sm:$0xff]
  %v663 = vld [vmem:[%s661 + $0x8] sm:$0xff]
  %v664 = vld [vmem:[%s661 + $0x10] sm:$0xff]
  %v665 = vld [vmem:[%s661 + $0x18] sm:$0xff]
  %v666 = vld [vmem:[%s661 + $0x20] sm:$0xff]
  %v667 = vld [vmem:[%s661 + $0x28] sm:$0xff]
  %v668 = vld [vmem:[%s661 + $0x30] sm:$0xff]
  %v669 = vld [vmem:[%s661 + $0x38] sm:$0xff]
  %v670 = vld [vmem:[%s661 + $0x40] sm:$0xff]
  %v671 = vld [vmem:[%s661 + $0x48] sm:$0xff]
  %v672 = vld [vmem:[%s661 + $0x50] sm:$0xff]
  %v673 = vld [vmem:[%s661 + $0x58] sm:$0xff]
  %v674 = vld [vmem:[%s661 + $0x60] sm:$0xff]
  %v675 = vld [vmem:[%s661 + $0x68] sm:$0xff]
  %v676 = vld [vmem:[%s661 + $0x70] sm:$0xff]
  %v677 = vld [vmem:[%s661 + $0x78] sm:$0xff]
  %v678 = vld [vmem:[%s661 + $0x80] sm:$0xff]
  %v679 = vld [vmem:[%s661 + $0x88] sm:$0xff]
  %v680 = vld [vmem:[%s661 + $0x90] sm:$0xff]
  %v681 = vld [vmem:[%s661 + $0x98] sm:$0xff]
  %v682 = vld [vmem:[%s661 + $0xa0] sm:$0xff]
  %v683 = vld [vmem:[%s661 + $0xa8] sm:$0xff]
  %v684 = vld [vmem:[%s661 + $0xb0] sm:$0xff]
  %v685 = vld [vmem:[%s661 + $0xb8] sm:$0xff]
  %v686 = vld [vmem:[%s661 + $0xc0] sm:$0xff]
  %v687 = vld [vmem:[%s661 + $0xc8] sm:$0xff]
  %v688 = vld [vmem:[%s661 + $0xd0] sm:$0xff]
  %v689 = vld [vmem:[%s661 + $0xd8] sm:$0xff]
  %v690 = vld [vmem:[%s661 + $0xe0] sm:$0xff]
  %v691 = vld [vmem:[%s661 + $0xe8] sm:$0xff]
  %v692 = vld [vmem:[%s661 + $0xf0] sm:$0xff]
  %v693 = vld [vmem:[%s661 + $0xf8] sm:$0xff]
  %v695 = vcombine.high %v660, %v660
  %697 = vmatprep.subr.mxu0 0.0
  %698 = vmatpush1.msra.mxu0 %v677
  %699 = vmatprep.subr.mxu0 0.0
  %700 = vmatpush1.msra.mxu0 %v676
  %701 = vmatprep.subr.mxu0 0.0
  %702 = vmatpush1.msra.mxu0 %v675
  %703 = vmatprep.subr.mxu0 0.0
  %704 = vmatpush1.msra.mxu0 %v674
  %705 = vmatprep.subr.mxu0 0.0
  %706 = vmatpush1.msra.mxu0 %v673
  %707 = vmatprep.subr.mxu0 0.0
  %708 = vmatpush1.msra.mxu0 %v672
  %709 = vmatprep.subr.mxu0 0.0
  %710 = vmatpush1.msra.mxu0 %v671
  %711 = vmatprep.subr.mxu0 0.0
  %712 = vmatpush1.msra.mxu0 %v670
  %713 = vmatprep.subr.mxu0 0.0
  %714 = vmatpush1.msra.mxu0 %v669
  %715 = vmatprep.subr.mxu0 0.0
  %716 = vmatpush1.msra.mxu0 %v668
  %717 = vmatprep.subr.mxu0 0.0
  %718 = vmatpush1.msra.mxu0 %v667
  %719 = vmatprep.subr.mxu0 0.0
  %720 = vmatpush1.msra.mxu0 %v666
  %721 = vmatprep.subr.mxu0 0.0
  %722 = vmatpush1.msra.mxu0 %v665
  %723 = vmatprep.subr.mxu0 0.0
  %724 = vmatpush1.msra.mxu0 %v664
  %725 = vmatprep.subr.mxu0 0.0
  %726 = vmatpush1.msra.mxu0 %v663
  %727 = vmatprep.subr.mxu0 0.0
  %728 = vmatpush1.msra.mxu0 %v662
  %729 = vmatprep.subr.mxu0 0.0
  %730 = vmatpush2.msra.mxu0 %v693
  %731 = vmatprep.subr.mxu0 0.0
  %732 = vmatpush2.msra.mxu0 %v692
  %733 = vmatprep.subr.mxu0 0.0
  %734 = vmatpush2.msra.mxu0 %v691
  %735 = vmatprep.subr.mxu0 0.0
  %736 = vmatpush2.msra.mxu0 %v690
  %737 = vmatprep.subr.mxu0 0.0
  %738 = vmatpush2.msra.mxu0 %v689
  %739 = vmatprep.subr.mxu0 0.0
  %740 = vmatpush2.msra.mxu0 %v688
  %741 = vmatprep.subr.mxu0 0.0
  %742 = vmatpush2.msra.mxu0 %v687
  %743 = vmatprep.subr.mxu0 0.0
  %744 = vmatpush2.msra.mxu0 %v686
  %745 = vmatprep.subr.mxu0 0.0
  %746 = vmatpush2.msra.mxu0 %v685
  %747 = vmatprep.subr.mxu0 0.0
  %748 = vmatpush2.msra.mxu0 %v684
  %749 = vmatprep.subr.mxu0 0.0
  %750 = vmatpush2.msra.mxu0 %v683
  %751 = vmatprep.subr.mxu0 0.0
  %752 = vmatpush2.msra.mxu0 %v682
  %753 = vmatprep.subr.mxu0 0.0
  %754 = vmatpush2.msra.mxu0 %v681
  %755 = vmatprep.subr.mxu0 0.0
  %756 = vmatpush2.msra.mxu0 %v680
  %757 = vmatprep.subr.mxu0 0.0
  %758 = vmatpush2.msra.mxu0 %v679
  %759 = vmatprep.subr.mxu0 0.0
  %760 = vmatpush2.msra.mxu0 %v678
  %761 = vmatprep.mubr.f32.mxu0 %v695
  %762 = vmatmul.mubr.f32.gmra.mxu0 %v660
  %v763 = vpop.f32.mrf.mxu0
  %v764 = vadd.f32 0.0, %v763
  %v765 = vpop.f32.mrf.mxu0
  %766 = vdwg.mxu0
  %v768 = vsel %vm140, %v764, 0
  %770 = vmatprep.subr.mxu0 0.0
  %771 = vmatpush1.msra.mxu0 0.0
  %772 = vmatprep.subr.mxu0 0.0
  %773 = vmatpush1.msra.mxu0 0.0
  %774 = vmatprep.subr.mxu0 0.0
  %775 = vmatpush1.msra.mxu0 0.0
  %776 = vmatprep.subr.mxu0 0.0
  %777 = vmatpush1.msra.mxu0 0.0
  %778 = vmatprep.subr.mxu0 0.0
  %779 = vmatpush1.msra.mxu0 0.0
  %780 = vmatprep.subr.mxu0 0.0
  %781 = vmatpush1.msra.mxu0 0.0
  %782 = vmatprep.subr.mxu0 0.0
  %783 = vmatpush1.msra.mxu0 0.0
  %784 = vmatprep.subr.mxu0 0.0
  %785 = vmatpush1.msra.mxu0 0.0
  %786 = vmatprep.subr.mxu0 0.0
  %787 = vmatpush1.msra.mxu0 0.0
  %788 = vmatprep.subr.mxu0 0.0
  %789 = vmatpush1.msra.mxu0 0.0
  %790 = vmatprep.subr.mxu0 0.0
  %791 = vmatpush1.msra.mxu0 0.0
  %792 = vmatprep.subr.mxu0 0.0
  %793 = vmatpush1.msra.mxu0 0.0
  %794 = vmatprep.subr.mxu0 0.0
  %795 = vmatpush1.msra.mxu0 0.0
  %796 = vmatprep.subr.mxu0 0.0
  %797 = vmatpush1.msra.mxu0 0.0
  %798 = vmatprep.subr.mxu0 0.0
  %799 = vmatpush1.msra.mxu0 0.0
  %800 = vmatprep.subr.mxu0 0.0
  %801 = vmatpush1.msra.mxu0 %v146
  %802 = vmatprep.subr.mxu0 0.0
  %803 = vmatpush2.msra.mxu0 0.0
  %804 = vmatprep.subr.mxu0 0.0
  %805 = vmatpush2.msra.mxu0 0.0
  %806 = vmatprep.subr.mxu0 0.0
  %807 = vmatpush2.msra.mxu0 0.0
  %808 = vmatprep.subr.mxu0 0.0
  %809 = vmatpush2.msra.mxu0 0.0
  %810 = vmatprep.subr.mxu0 0.0
  %811 = vmatpush2.msra.mxu0 0.0
  %812 = vmatprep.subr.mxu0 0.0
  %813 = vmatpush2.msra.mxu0 0.0
  %814 = vmatprep.subr.mxu0 0.0
  %815 = vmatpush2.msra.mxu0 0.0
  %816 = vmatprep.subr.mxu0 0.0
  %817 = vmatpush2.msra.mxu0 0.0
  %818 = vmatprep.subr.mxu0 0.0
  %819 = vmatpush2.msra.mxu0 0.0
  %820 = vmatprep.subr.mxu0 0.0
  %821 = vmatpush2.msra.mxu0 0.0
  %822 = vmatprep.subr.mxu0 0.0
  %823 = vmatpush2.msra.mxu0 0.0
  %824 = vmatprep.subr.mxu0 0.0
  %825 = vmatpush2.msra.mxu0 0.0
  %826 = vmatprep.subr.mxu0 0.0
  %827 = vmatpush2.msra.mxu0 0.0
  %828 = vmatprep.subr.mxu0 0.0
  %829 = vmatpush2.msra.mxu0 0.0
  %830 = vmatprep.subr.mxu0 0.0
  %831 = vmatpush2.msra.mxu0 0.0
  %832 = vmatprep.subr.mxu0 0.0
  %833 = vmatpush2.msra.mxu0 0.0
  %834 = vmatprep.mubr.f32.mxu0 0.0
  %835 = vmatmul.mubr.f32.gmra.mxu0 %v768
  %v836 = vpop.f32.mrf.mxu0
  %v837 = vadd.f32 %v138, %v836
  %v838 = vpop.f32.mrf.mxu0
  %839 = vdwg.mxu0
  %v840 = vmax.f32 %v837, 0.0
  %v842 = vsel %vm225, %v840, 0
  %844 = vmatprep.subr.mxu0 0.0
  %845 = vmatpush1.msra.mxu0 0.0
  %846 = vmatprep.subr.mxu0 0.0
  %847 = vmatpush1.msra.mxu0 0.0
  %848 = vmatprep.subr.mxu0 0.0
  %849 = vmatpush1.msra.mxu0 0.0
  %850 = vmatprep.subr.mxu0 0.0
  %851 = vmatpush1.msra.mxu0 0.0
  %852 = vmatprep.subr.mxu0 0.0
  %853 = vmatpush1.msra.mxu0 0.0
  %854 = vmatprep.subr.mxu0 0.0
  %855 = vmatpush1.msra.mxu0 0.0
  %856 = vmatprep.subr.mxu0 0.0
  %857 = vmatpush1.msra.mxu0 0.0
  %858 = vmatprep.subr.mxu0 0.0
  %859 = vmatpush1.msra.mxu0 0.0
  %860 = vmatprep.subr.mxu0 0.0
  %861 = vmatpush1.msra.mxu0 0.0
  %862 = vmatprep.subr.mxu0 0.0
  %863 = vmatpush1.msra.mxu0 0.0
  %864 = vmatprep.subr.mxu0 0.0
  %865 = vmatpush1.msra.mxu0 0.0
  %866 = vmatprep.subr.mxu0 0.0
  %867 = vmatpush1.msra.mxu0 0.0
  %868 = vmatprep.subr.mxu0 0.0
  %869 = vmatpush1.msra.mxu0 0.0
  %870 = vmatprep.subr.mxu0 0.0
  %871 = vmatpush1.msra.mxu0 0.0
  %872 = vmatprep.subr.mxu0 0.0
  %873 = vmatpush1.msra.mxu0 %v230
  %874 = vmatprep.subr.mxu0 0.0
  %875 = vmatpush1.msra.mxu0 %v24
  %876 = vmatprep.subr.mxu0 0.0
  %877 = vmatpush2.msra.mxu0 0.0
  %878 = vmatprep.subr.mxu0 0.0
  %879 = vmatpush2.msra.mxu0 0.0
  %880 = vmatprep.subr.mxu0 0.0
  %881 = vmatpush2.msra.mxu0 0.0
  %882 = vmatprep.subr.mxu0 0.0
  %883 = vmatpush2.msra.mxu0 0.0
  %884 = vmatprep.subr.mxu0 0.0
  %885 = vmatpush2.msra.mxu0 0.0
  %886 = vmatprep.subr.mxu0 0.0
  %887 = vmatpush2.msra.mxu0 0.0
  %888 = vmatprep.subr.mxu0 0.0
  %889 = vmatpush2.msra.mxu0 0.0
  %890 = vmatprep.subr.mxu0 0.0
  %891 = vmatpush2.msra.mxu0 0.0
  %892 = vmatprep.subr.mxu0 0.0
  %893 = vmatpush2.msra.mxu0 0.0
  %894 = vmatprep.subr.mxu0 0.0
  %895 = vmatpush2.msra.mxu0 0.0
  %896 = vmatprep.subr.mxu0 0.0
  %897 = vmatpush2.msra.mxu0 0.0
  %898 = vmatprep.subr.mxu0 0.0
  %899 = vmatpush2.msra.mxu0 0.0
  %900 = vmatprep.subr.mxu0 0.0
  %901 = vmatpush2.msra.mxu0 0.0
  %902 = vmatprep.subr.mxu0 0.0
  %903 = vmatpush2.msra.mxu0 0.0
  %904 = vmatprep.subr.mxu0 0.0
  %905 = vmatpush2.msra.mxu0 0.0
  %906 = vmatprep.subr.mxu0 0.0
  %907 = vmatpush2.msra.mxu0 0.0
  %908 = vmatprep.mubr.f32.mxu0 0.0
  %909 = vmatmul.mubr.f32.gmra.mxu0 %v842
  %v910 = vpop.f32.mrf.mxu0
  %v911 = vadd.f32 %v223, %v910
  %v912 = vpop.f32.mrf.mxu0
  %913 = vdwg.mxu0
  %v914 = vmul.f32 %v911, 0.0625
  %v916 = vsel %vm140, %v662, 0
  %v919 = vsel %vm140, %v663, 0
  %v922 = vsel %vm140, %v664, 0
  %v925 = vsel %vm140, %v665, 0
  %v928 = vsel %vm140, %v666, 0
  %v931 = vsel %vm140, %v667, 0
  %v934 = vsel %vm140, %v668, 0
  %v937 = vsel %vm140, %v669, 0
  %v940 = vsel %vm140, %v670, 0
  %v943 = vsel %vm140, %v671, 0
  %v946 = vsel %vm140, %v672, 0
  %v949 = vsel %vm140, %v673, 0
  %v952 = vsel %vm140, %v674, 0
  %v955 = vsel %vm140, %v675, 0
  %v958 = vsel %vm140, %v676, 0
  %v961 = vsel %vm140, %v677, 0
  %v964 = vsel %vm140, %v678, 0
  %v967 = vsel %vm140, %v679, 0
  %v970 = vsel %vm140, %v680, 0
  %v973 = vsel %vm140, %v681, 0
  %v976 = vsel %vm140, %v682, 0
  %v979 = vsel %vm140, %v683, 0
  %v982 = vsel %vm140, %v684, 0
  %v985 = vsel %vm140, %v685, 0
  %v988 = vsel %vm140, %v686, 0
  %v991 = vsel %vm140, %v687, 0
  %v994 = vsel %vm140, %v688, 0
  %v997 = vsel %vm140, %v689, 0
  %v1000 = vsel %vm140, %v690, 0
  %v1003 = vsel %vm140, %v691, 0
  %v1006 = vsel %vm140, %v692, 0
  %v1009 = vsel %vm140, %v693, 0
  %v1012 = vsel %vm144, %v914, 0
  %1014 = vmatprep.subr.mxu0 0.0
  %1015 = vmatpush1.msra.mxu0 0.0
  %1016 = vmatprep.subr.mxu0 0.0
  %1017 = vmatpush1.msra.mxu0 0.0
  %1018 = vmatprep.subr.mxu0 0.0
  %1019 = vmatpush1.msra.mxu0 0.0
  %1020 = vmatprep.subr.mxu0 0.0
  %1021 = vmatpush1.msra.mxu0 0.0
  %1022 = vmatprep.subr.mxu0 0.0
  %1023 = vmatpush1.msra.mxu0 0.0
  %1024 = vmatprep.subr.mxu0 0.0
  %1025 = vmatpush1.msra.mxu0 0.0
  %1026 = vmatprep.subr.mxu0 0.0
  %1027 = vmatpush1.msra.mxu0 0.0
  %1028 = vmatprep.subr.mxu0 0.0
  %1029 = vmatpush1.msra.mxu0 0.0
  %1030 = vmatprep.subr.mxu0 0.0
  %1031 = vmatpush1.msra.mxu0 0.0
  %1032 = vmatprep.subr.mxu0 0.0
  %1033 = vmatpush1.msra.mxu0 0.0
  %1034 = vmatprep.subr.mxu0 0.0
  %1035 = vmatpush1.msra.mxu0 0.0
  %1036 = vmatprep.subr.mxu0 0.0
  %1037 = vmatpush1.msra.mxu0 0.0
  %1038 = vmatprep.subr.mxu0 0.0
  %1039 = vmatpush1.msra.mxu0 0.0
  %1040 = vmatprep.subr.mxu0 0.0
  %1041 = vmatpush1.msra.mxu0 0.0
  %1042 = vmatprep.subr.mxu0 0.0
  %1043 = vmatpush1.msra.mxu0 0.0
  %1044 = vmatprep.subr.mxu0 0.0
  %1045 = vmatpush1.msra.mxu0 %v1012
  %1046 = vmatprep.subr.mxu0 0.0
  %1047 = vmatpush2.msra.mxu0 0.0
  %1048 = vmatprep.subr.mxu0 0.0
  %1049 = vmatpush2.msra.mxu0 0.0
  %1050 = vmatprep.subr.mxu0 0.0
  %1051 = vmatpush2.msra.mxu0 0.0
  %1052 = vmatprep.subr.mxu0 0.0
  %1053 = vmatpush2.msra.mxu0 0.0
  %1054 = vmatprep.subr.mxu0 0.0
  %1055 = vmatpush2.msra.mxu0 0.0
  %1056 = vmatprep.subr.mxu0 0.0
  %1057 = vmatpush2.msra.mxu0 0.0
  %1058 = vmatprep.subr.mxu0 0.0
  %1059 = vmatpush2.msra.mxu0 0.0
  %1060 = vmatprep.subr.mxu0 0.0
  %1061 = vmatpush2.msra.mxu0 0.0
  %1062 = vmatprep.subr.mxu0 0.0
  %1063 = vmatpush2.msra.mxu0 0.0
  %1064 = vmatprep.subr.mxu0 0.0
  %1065 = vmatpush2.msra.mxu0 0.0
  %1066 = vmatprep.subr.mxu0 0.0
  %1067 = vmatpush2.msra.mxu0 0.0
  %1068 = vmatprep.subr.mxu0 0.0
  %1069 = vmatpush2.msra.mxu0 0.0
  %1070 = vmatprep.subr.mxu0 0.0
  %1071 = vmatpush2.msra.mxu0 0.0
  %1072 = vmatprep.subr.mxu0 0.0
  %1073 = vmatpush2.msra.mxu0 0.0
  %1074 = vmatprep.subr.mxu0 0.0
  %1075 = vmatpush2.msra.mxu0 0.0
  %1076 = vmatprep.subr.mxu0 0.0
  %1077 = vmatpush2.msra.mxu0 0.0
  %1078 = vmatprep.mubr.f32.mxu0 0.0
  %1079 = vmatmul.mubr.f32.gmra.mxu0 %v916
  %v1080 = vpop.f32.mrf.mxu0
  %v1081 = vadd.f32 0.0, %v1080
  %v1082 = vpop.f32.mrf.mxu0
  %1083 = vmatprep.mubr.f32.mxu0 0.0
  %1084 = vmatmul.mubr.f32.gmra.mxu0 %v919
  %v1085 = vpop.f32.mrf.mxu0
  %v1086 = vadd.f32 0.0, %v1085
  %v1087 = vpop.f32.mrf.mxu0
  %1088 = vmatprep.mubr.f32.mxu0 0.0
  %1089 = vmatmul.mubr.f32.gmra.mxu0 %v922
  %v1090 = vpop.f32.mrf.mxu0
  %v1091 = vadd.f32 0.0, %v1090
  %v1092 = vpop.f32.mrf.mxu0
  %1093 = vmatprep.mubr.f32.mxu0 0.0
  %1094 = vmatmul.mubr.f32.gmra.mxu0 %v925
  %v1095 = vpop.f32.mrf.mxu0
  %v1096 = vadd.f32 0.0, %v1095
  %v1097 = vpop.f32.mrf.mxu0
  %1098 = vmatprep.mubr.f32.mxu0 0.0
  %1099 = vmatmul.mubr.f32.gmra.mxu0 %v928
  %v1100 = vpop.f32.mrf.mxu0
  %v1101 = vadd.f32 0.0, %v1100
  %v1102 = vpop.f32.mrf.mxu0
  %1103 = vmatprep.mubr.f32.mxu0 0.0
  %1104 = vmatmul.mubr.f32.gmra.mxu0 %v931
  %v1105 = vpop.f32.mrf.mxu0
  %v1106 = vadd.f32 0.0, %v1105
  %v1107 = vpop.f32.mrf.mxu0
  %1108 = vmatprep.mubr.f32.mxu0 0.0
  %1109 = vmatmul.mubr.f32.gmra.mxu0 %v934
  %v1110 = vpop.f32.mrf.mxu0
  %v1111 = vadd.f32 0.0, %v1110
  %v1112 = vpop.f32.mrf.mxu0
  %1113 = vmatprep.mubr.f32.mxu0 0.0
  %1114 = vmatmul.mubr.f32.gmra.mxu0 %v937
  %v1115 = vpop.f32.mrf.mxu0
  %v1116 = vadd.f32 0.0, %v1115
  %v1117 = vpop.f32.mrf.mxu0
  %1118 = vmatprep.mubr.f32.mxu0 0.0
  %1119 = vmatmul.mubr.f32.gmra.mxu0 %v940
  %v1120 = vpop.f32.mrf.mxu0
  %v1121 = vadd.f32 0.0, %v1120
  %v1122 = vpop.f32.mrf.mxu0
  %1123 = vmatprep.mubr.f32.mxu0 0.0
  %1124 = vmatmul.mubr.f32.gmra.mxu0 %v943
  %v1125 = vpop.f32.mrf.mxu0
  %v1126 = vadd.f32 0.0, %v1125
  %v1127 = vpop.f32.mrf.mxu0
  %1128 = vmatprep.mubr.f32.mxu0 0.0
  %1129 = vmatmul.mubr.f32.gmra.mxu0 %v946
  %v1130 = vpop.f32.mrf.mxu0
  %v1131 = vadd.f32 0.0, %v1130
  %v1132 = vpop.f32.mrf.mxu0
  %1133 = vmatprep.mubr.f32.mxu0 0.0
  %1134 = vmatmul.mubr.f32.gmra.mxu0 %v949
  %v1135 = vpop.f32.mrf.mxu0
  %v1136 = vadd.f32 0.0, %v1135
  %v1137 = vpop.f32.mrf.mxu0
  %1138 = vmatprep.mubr.f32.mxu0 0.0
  %1139 = vmatmul.mubr.f32.gmra.mxu0 %v952
  %v1140 = vpop.f32.mrf.mxu0
  %v1141 = vadd.f32 0.0, %v1140
  %v1142 = vpop.f32.mrf.mxu0
  %1143 = vmatprep.mubr.f32.mxu0 0.0
  %1144 = vmatmul.mubr.f32.gmra.mxu0 %v955
  %v1145 = vpop.f32.mrf.mxu0
  %v1146 = vadd.f32 0.0, %v1145
  %v1147 = vpop.f32.mrf.mxu0
  %1148 = vmatprep.mubr.f32.mxu0 0.0
  %1149 = vmatmul.mubr.f32.gmra.mxu0 %v958
  %v1150 = vpop.f32.mrf.mxu0
  %v1151 = vadd.f32 0.0, %v1150
  %v1152 = vpop.f32.mrf.mxu0
  %1153 = vmatprep.mubr.f32.mxu0 0.0
  %1154 = vmatmul.mubr.f32.gmra.mxu0 %v961
  %v1155 = vpop.f32.mrf.mxu0
  %v1156 = vadd.f32 0.0, %v1155
  %v1157 = vpop.f32.mrf.mxu0
  %1158 = vmatprep.mubr.f32.mxu0 0.0
  %1159 = vmatmul.mubr.f32.gmra.mxu0 %v964
  %v1160 = vpop.f32.mrf.mxu0
  %v1161 = vadd.f32 0.0, %v1160
  %v1162 = vpop.f32.mrf.mxu0
  %1163 = vmatprep.mubr.f32.mxu0 0.0
  %1164 = vmatmul.mubr.f32.gmra.mxu0 %v967
  %v1165 = vpop.f32.mrf.mxu0
  %v1166 = vadd.f32 0.0, %v1165
  %v1167 = vpop.f32.mrf.mxu0
  %1168 = vmatprep.mubr.f32.mxu0 0.0
  %1169 = vmatmul.mubr.f32.gmra.mxu0 %v970
  %v1170 = vpop.f32.mrf.mxu0
  %v1171 = vadd.f32 0.0, %v1170
  %v1172 = vpop.f32.mrf.mxu0
  %1173 = vmatprep.mubr.f32.mxu0 0.0
  %1174 = vmatmul.mubr.f32.gmra.mxu0 %v973
  %v1175 = vpop.f32.mrf.mxu0
  %v1176 = vadd.f32 0.0, %v1175
  %v1177 = vpop.f32.mrf.mxu0
  %1178 = vmatprep.mubr.f32.mxu0 0.0
  %1179 = vmatmul.mubr.f32.gmra.mxu0 %v976
  %v1180 = vpop.f32.mrf.mxu0
  %v1181 = vadd.f32 0.0, %v1180
  %v1182 = vpop.f32.mrf.mxu0
  %1183 = vmatprep.mubr.f32.mxu0 0.0
  %1184 = vmatmul.mubr.f32.gmra.mxu0 %v979
  %v1185 = vpop.f32.mrf.mxu0
  %v1186 = vadd.f32 0.0, %v1185
  %v1187 = vpop.f32.mrf.mxu0
  %1188 = vmatprep.mubr.f32.mxu0 0.0
  %1189 = vmatmul.mubr.f32.gmra.mxu0 %v982
  %v1190 = vpop.f32.mrf.mxu0
  %v1191 = vadd.f32 0.0, %v1190
  %v1192 = vpop.f32.mrf.mxu0
  %1193 = vmatprep.mubr.f32.mxu0 0.0
  %1194 = vmatmul.mubr.f32.gmra.mxu0 %v985
  %v1195 = vpop.f32.mrf.mxu0
  %v1196 = vadd.f32 0.0, %v1195
  %v1197 = vpop.f32.mrf.mxu0
  %1198 = vmatprep.mubr.f32.mxu0 0.0
  %1199 = vmatmul.mubr.f32.gmra.mxu0 %v988
  %v1200 = vpop.f32.mrf.mxu0
  %v1201 = vadd.f32 0.0, %v1200
  %v1202 = vpop.f32.mrf.mxu0
  %1203 = vmatprep.mubr.f32.mxu0 0.0
  %1204 = vmatmul.mubr.f32.gmra.mxu0 %v991
  %v1205 = vpop.f32.mrf.mxu0
  %v1206 = vadd.f32 0.0, %v1205
  %v1207 = vpop.f32.mrf.mxu0
  %1208 = vmatprep.mubr.f32.mxu0 0.0
  %1209 = vmatmul.mubr.f32.gmra.mxu0 %v994
  %v1210 = vpop.f32.mrf.mxu0
  %v1211 = vadd.f32 0.0, %v1210
  %v1212 = vpop.f32.mrf.mxu0
  %1213 = vmatprep.mubr.f32.mxu0 0.0
  %1214 = vmatmul.mubr.f32.gmra.mxu0 %v997
  %v1215 = vpop.f32.mrf.mxu0
  %v1216 = vadd.f32 0.0, %v1215
  %v1217 = vpop.f32.mrf.mxu0
  %1218 = vmatprep.mubr.f32.mxu0 0.0
  %1219 = vmatmul.mubr.f32.gmra.mxu0 %v1000
  %v1220 = vpop.f32.mrf.mxu0
  %v1221 = vadd.f32 0.0, %v1220
  %v1222 = vpop.f32.mrf.mxu0
  %1223 = vmatprep.mubr.f32.mxu0 0.0
  %1224 = vmatmul.mubr.f32.gmra.mxu0 %v1003
  %v1225 = vpop.f32.mrf.mxu0
  %v1226 = vadd.f32 0.0, %v1225
  %v1227 = vpop.f32.mrf.mxu0
  %1228 = vmatprep.mubr.f32.mxu0 0.0
  %1229 = vmatmul.mubr.f32.gmra.mxu0 %v1006
  %v1230 = vpop.f32.mrf.mxu0
  %v1231 = vadd.f32 0.0, %v1230
  %v1232 = vpop.f32.mrf.mxu0
  %1233 = vmatprep.mubr.f32.mxu0 0.0
  %1234 = vmatmul.mubr.f32.gmra.mxu0 %v1009
  %v1235 = vpop.f32.mrf.mxu0
  %v1236 = vadd.f32 0.0, %v1235
  %v1237 = vpop.f32.mrf.mxu0
  %1238 = vdwg.mxu0
  %s1239 = scalar_lea.vmem %s6, 256
  %1240 = vst.msk [vmem:[%s1239] sm:$0xff] %vm140, %v1081
  %1241 = vst.msk [vmem:[%s1239 + $0x8] sm:$0xff] %vm140, %v1086
  %1242 = vst.msk [vmem:[%s1239 + $0x10] sm:$0xff] %vm140, %v1091
  %1243 = vst.msk [vmem:[%s1239 + $0x18] sm:$0xff] %vm140, %v1096
  %1244 = vst.msk [vmem:[%s1239 + $0x20] sm:$0xff] %vm140, %v1101
  %1245 = vst.msk [vmem:[%s1239 + $0x28] sm:$0xff] %vm140, %v1106
  %1246 = vst.msk [vmem:[%s1239 + $0x30] sm:$0xff] %vm140, %v1111
  %1247 = vst.msk [vmem:[%s1239 + $0x38] sm:$0xff] %vm140, %v1116
  %1248 = vst.msk [vmem:[%s1239 + $0x40] sm:$0xff] %vm140, %v1121
  %1249 = vst.msk [vmem:[%s1239 + $0x48] sm:$0xff] %vm140, %v1126
  %1250 = vst.msk [vmem:[%s1239 + $0x50] sm:$0xff] %vm140, %v1131
  %1251 = vst.msk [vmem:[%s1239 + $0x58] sm:$0xff] %vm140, %v1136
  %1252 = vst.msk [vmem:[%s1239 + $0x60] sm:$0xff] %vm140, %v1141
  %1253 = vst.msk [vmem:[%s1239 + $0x68] sm:$0xff] %vm140, %v1146
  %1254 = vst.msk [vmem:[%s1239 + $0x70] sm:$0xff] %vm140, %v1151
  %1255 = vst.msk [vmem:[%s1239 + $0x78] sm:$0xff] %vm140, %v1156
  %1256 = vst.msk [vmem:[%s1239 + $0x80] sm:$0xff] %vm140, %v1161
  %1257 = vst.msk [vmem:[%s1239 + $0x88] sm:$0xff] %vm140, %v1166
  %1258 = vst.msk [vmem:[%s1239 + $0x90] sm:$0xff] %vm140, %v1171
  %1259 = vst.msk [vmem:[%s1239 + $0x98] sm:$0xff] %vm140, %v1176
  %1260 = vst.msk [vmem:[%s1239 + $0xa0] sm:$0xff] %vm140, %v1181
  %1261 = vst.msk [vmem:[%s1239 + $0xa8] sm:$0xff] %vm140, %v1186
  %1262 = vst.msk [vmem:[%s1239 + $0xb0] sm:$0xff] %vm140, %v1191
  %1263 = vst.msk [vmem:[%s1239 + $0xb8] sm:$0xff] %vm140, %v1196
  %1264 = vst.msk [vmem:[%s1239 + $0xc0] sm:$0xff] %vm140, %v1201
  %1265 = vst.msk [vmem:[%s1239 + $0xc8] sm:$0xff] %vm140, %v1206
  %1266 = vst.msk [vmem:[%s1239 + $0xd0] sm:$0xff] %vm140, %v1211
  %1267 = vst.msk [vmem:[%s1239 + $0xd8] sm:$0xff] %vm140, %v1216
  %1268 = vst.msk [vmem:[%s1239 + $0xe0] sm:$0xff] %vm140, %v1221
  %1269 = vst.msk [vmem:[%s1239 + $0xe8] sm:$0xff] %vm140, %v1226
  %1270 = vst.msk [vmem:[%s1239 + $0xf0] sm:$0xff] %vm140, %v1231
  %1271 = vst.msk [vmem:[%s1239 + $0xf8] sm:$0xff] %vm140, %v1236
  // Predicated region
  $region26: #{tpu_custom_call.1} parent=0 // pred_check
    _
  $region27: #{tpu_custom_call.1} parent=0 // pred_check_branch
    %1273 = sbr.rel (0) target = $region29
  $region28: #{tpu_custom_call.1} parent=0 // pred_region
    _
  $region29: #{tpu_custom_call.1} parent=0 // pred_fallthru
    _
  // Predicated region
  $region30: #{tpu_custom_call.1} parent=0 // pred_check
    _
  $region31: #{tpu_custom_call.1} parent=0 // pred_check_branch
    %1275 = sbr.rel (0) target = $region33
  $region32: #{tpu_custom_call.1} parent=0 // pred_region
    _
  $region33: #{tpu_custom_call.1} parent=0 // pred_fallthru
    _

</llo_original>
